<compile_context>
chip_gen: v7x
topology: tpu7x:2x2x1
jax: 0.10.0
libtpu: 0.0.40
codegen_flags: <defaults>
</compile_context>

<pallas_src>
import functools
import math

import jax
import jax.numpy as jnp
from jax.experimental import pallas as pl
from jax.experimental.pallas import tpu as pltpu

# ---------------- config (small synthetic BERT) ----------------
VOCAB = 64
TYPE_VOCAB = 2
MAX_POS = 16
HIDDEN = 32
HEADS = 2
HEAD_DIM = HIDDEN // HEADS
LAYERS = 2
INTERMEDIATE = 64
NUM_CLASS = 3
NPAD = 128          # lane-dense padded classifier width
OUT_ROWS = 8        # sublane-dense padded classifier rows
BATCH = 2
SEQ = 8
EPS = 1e-12


# ---------------- in-kernel helpers ----------------
def _layernorm(h, g, b):
    mu = jnp.mean(h, axis=-1, keepdims=True)
    d = h - mu
    var = jnp.mean(d * d, axis=-1, keepdims=True)
    return d * jax.lax.rsqrt(var + EPS) * g + b


def _gelu(x):
    # TODO(synk): tanh-approx GELU; HF BERT default is the exact erf form (~1e-3 rel diff).
    c = 0.7978845608028654  # sqrt(2/pi)
    return 0.5 * x * (1.0 + jnp.tanh(c * (x + 0.044715 * x * x * x)))


# ---------------- fused whole-model kernel (grid-less, layers unrolled) ----------------
def _bert_kernel(emb_ref, embg_ref, embb_ref, mask_ref,
                 wqkv_ref, bqkv_ref, wo_ref, bo_ref,
                 ln1g_ref, ln1b_ref, w1_ref, b1_ref, w2_ref, b2_ref,
                 ln2g_ref, ln2b_ref,
                 poolw_ref, poolb_ref, clfw_ref, clfb_ref,
                 logits_ref,
                 *, batch, seq, heads, head_dim, layers):
    m = batch * seq
    hh = heads * head_dim                                  # = HIDDEN

    # ---- embedding LayerNorm ----
    x = _layernorm(emb_ref[...], embg_ref[...], embb_ref[...])        # (M, H)
    mask = mask_ref[...]                                              # (M, M) block-diag additive

    # ---- encoder layers (statically unrolled, weights resident in VMEM) ----
    for l in range(layers):
        # fused QKV projection: one (M, H) @ (H, 3H) matmul, scale folded into Q cols
        wqkv_l = wqkv_ref[l]                                          # (H, 3H)
        qkv = jnp.dot(x, wqkv_l, preferred_element_type=jnp.float32) + bqkv_ref[l]  # (M, 3H)
        wo_l = wo_ref[l]                                              # (H, H), rows = head dims

        acc = None
        for h in range(heads):
            off = h * head_dim
            q = qkv[:, off:off + head_dim]                            # (M, dh)
            k = qkv[:, hh + off:hh + off + head_dim]                  # (M, dh)
            v = qkv[:, 2 * hh + off:2 * hh + off + head_dim]          # (M, dh)
            s = jax.lax.dot_general(
                q, k, dimension_numbers=(((1,), (1,)), ((), ())),
                preferred_element_type=jnp.float32)                   # (M, M)
            s = s + mask                                              # pad + cross-batch mask
            s = s - jnp.max(s, axis=-1, keepdims=True)
            p = jnp.exp(s)
            p = p / jnp.sum(p, axis=-1, keepdims=True)
            ctx = jnp.dot(p, v, preferred_element_type=jnp.float32)   # (M, dh)
            # head-merge folded into the output projection: sum_h ctx_h @ Wo[h]
            contrib = jnp.dot(ctx, wo_l[off:off + head_dim, :],
                              preferred_element_type=jnp.float32)     # (M, H)
            acc = contrib if acc is None else acc + contrib

        attn_out = acc + bo_ref[l]                                    # (M, H)
        x = _layernorm(attn_out + x, ln1g_ref[l], ln1b_ref[l])        # add + LN1

        # feed-forward: matmul + GELU + matmul + add + LN2
        h1 = jnp.dot(x, w1_ref[l], preferred_element_type=jnp.float32) + b1_ref[l]
        h1 = _gelu(h1)
        h2 = jnp.dot(h1, w2_ref[l], preferred_element_type=jnp.float32) + b2_ref[l]
        x = _layernorm(h2 + x, ln2g_ref[l], ln2b_ref[l])

    # ---- pooler (tanh on CLS tokens) + classifier, single dense (8, 128) store ----
    cls = jnp.concatenate([x[b * seq:b * seq + 1, :] for b in range(batch)], axis=0)  # (B, H)
    pooled = jnp.tanh(
        jnp.dot(cls, poolw_ref[...], preferred_element_type=jnp.float32) + poolb_ref[...])
    logits = jnp.dot(pooled, clfw_ref[...], preferred_element_type=jnp.float32) + clfb_ref[...]
    pad = jnp.zeros((logits_ref.shape[0] - batch, logits_ref.shape[1]), jnp.float32)
    logits_ref[...] = jnp.concatenate([logits, pad], axis=0)          # unmasked (8, 128) store


# ---------------- parameter init (deterministic, synthetic, pre-stacked per layer) ----------------
def init_params(key):
    keys = iter(jax.random.split(key, 32))

    def w(shape, scale=0.02):
        return (scale * jax.random.normal(next(keys), shape)).astype(jnp.float32)

    def zeros(shape):
        return jnp.zeros(shape, jnp.float32)

    def ones(shape):
        return jnp.ones(shape, jnp.float32)

    inv_sqrt_dh = 1.0 / math.sqrt(HEAD_DIM)
    wq = w((LAYERS, HIDDEN, HIDDEN)) * inv_sqrt_dh     # softmax scale folded into Wq
    wk = w((LAYERS, HIDDEN, HIDDEN))
    wv = w((LAYERS, HIDDEN, HIDDEN))
    clf_w = w((HIDDEN, NUM_CLASS))
    clf_b = zeros((1, NUM_CLASS))

    params = {
        "word_emb": w((VOCAB, HIDDEN)),
        "pos_emb": w((MAX_POS, HIDDEN)),
        "type_emb": w((TYPE_VOCAB, HIDDEN)),
        "emb_ln_g": ones((1, HIDDEN)), "emb_ln_b": zeros((1, HIDDEN)),
        # fused QKV: columns = [Q heads | K heads | V heads], each head a fixed 16-lane chunk
        "wqkv": jnp.concatenate([wq, wk, wv], axis=-1),               # (L, H, 3H)
        "bqkv": zeros((LAYERS, 1, 3 * HIDDEN)),
        # out-proj in standard layout; rows h*dh:(h+1)*dh consumed per head in-kernel
        "wo": w((LAYERS, HIDDEN, HIDDEN)),
        "bo": zeros((LAYERS, 1, HIDDEN)),
        "ln1_g": ones((LAYERS, 1, HIDDEN)), "ln1_b": zeros((LAYERS, 1, HIDDEN)),
        "w1": w((LAYERS, HIDDEN, INTERMEDIATE)), "b1": zeros((LAYERS, 1, INTERMEDIATE)),
        "w2": w((LAYERS, INTERMEDIATE, HIDDEN)), "b2": zeros((LAYERS, 1, HIDDEN)),
        "ln2_g": ones((LAYERS, 1, HIDDEN)), "ln2_b": zeros((LAYERS, 1, HIDDEN)),
        "pool_w": w((HIDDEN, HIDDEN)), "pool_b": zeros((1, HIDDEN)),
        # classifier padded to 128 output lanes (zeros beyond NUM_CLASS)
        "clf_w": jnp.pad(clf_w, ((0, 0), (0, NPAD - NUM_CLASS))),
        "clf_b": jnp.pad(clf_b, ((0, 0), (0, NPAD - NUM_CLASS))),
    }
    return params


# ---------------- BertCLF forward ----------------
def bert_clf_forward(params, input_ids, attention_mask, token_type_ids):
    B, S = input_ids.shape
    H = HIDDEN
    M = B * S

    # embeddings (gathers stay in plain JAX)
    pos_ids = jnp.arange(S)
    emb = (params["word_emb"][input_ids]
           + params["pos_emb"][pos_ids][None, :, :]
           + params["type_emb"][token_type_ids])
    emb = emb.reshape(M, H).astype(jnp.float32)

    # block-diagonal additive mask (M, M): 0 where key is a kept token of the SAME
    # batch element, -1e9 for pad tokens and all cross-batch pairs.
    batch_id = jnp.repeat(jnp.arange(B), S)
    same_batch = (batch_id[:, None] == batch_id[None, :]).astype(jnp.float32)
    key_keep = attention_mask.astype(jnp.float32).reshape(M)
    add_mask = (1.0 - same_batch * key_keep[None, :]) * -1e9

    args = (emb, params["emb_ln_g"], params["emb_ln_b"], add_mask,
            params["wqkv"], params["bqkv"], params["wo"], params["bo"],
            params["ln1_g"], params["ln1_b"], params["w1"], params["b1"],
            params["w2"], params["b2"], params["ln2_g"], params["ln2_b"],
            params["pool_w"], params["pool_b"], params["clf_w"], params["clf_b"])

    vmem = pltpu.MemorySpace.VMEM
    kernel = functools.partial(_bert_kernel, batch=B, seq=S, heads=HEADS,
                               head_dim=HEAD_DIM, layers=LAYERS)

    logits_padded = pl.pallas_call(
        kernel,
        out_shape=jax.ShapeDtypeStruct((OUT_ROWS, NPAD), jnp.float32),
        in_specs=[pl.BlockSpec(memory_space=vmem) for _ in range(len(args))],
        out_specs=pl.BlockSpec(memory_space=vmem),
    )(*args)

    return logits_padded[:B, :NUM_CLASS]


if __name__ == "__main__":
    key = jax.random.PRNGKey(0)
    pkey, ikey = jax.random.split(key)
    params = init_params(pkey)

    input_ids = jax.random.randint(ikey, (BATCH, SEQ), 0, VOCAB, dtype=jnp.int32)
    attention_mask = jnp.array([[1] * SEQ, [1] * 6 + [0] * 2], dtype=jnp.int32)
    token_type_ids = jnp.zeros((BATCH, SEQ), dtype=jnp.int32)

    fwd = jax.jit(bert_clf_forward)
    logits = fwd(params, input_ids, attention_mask, token_type_ids)
    jax.block_until_ready(logits)
    assert logits.shape == (BATCH, NUM_CLASS)
    assert bool(jnp.all(jnp.isfinite(logits)))
    print("KERNEL_OK")
</pallas_src>

<mosaic_0001>
module attributes {stable_mosaic.version = 11 : i64} {
  func.func @_bert_kernel(%arg0: memref<16x32xf32, #tpu.memory_space<vmem>>, %arg1: memref<1x32xf32, #tpu.memory_space<vmem>>, %arg2: memref<1x32xf32, #tpu.memory_space<vmem>>, %arg3: memref<16x16xf32, #tpu.memory_space<vmem>>, %arg4: memref<2x32x96xf32, #tpu.memory_space<vmem>>, %arg5: memref<2x1x96xf32, #tpu.memory_space<vmem>>, %arg6: memref<2x32x32xf32, #tpu.memory_space<vmem>>, %arg7: memref<2x1x32xf32, #tpu.memory_space<vmem>>, %arg8: memref<2x1x32xf32, #tpu.memory_space<vmem>>, %arg9: memref<2x1x32xf32, #tpu.memory_space<vmem>>, %arg10: memref<2x32x64xf32, #tpu.memory_space<vmem>>, %arg11: memref<2x1x64xf32, #tpu.memory_space<vmem>>, %arg12: memref<2x64x32xf32, #tpu.memory_space<vmem>>, %arg13: memref<2x1x32xf32, #tpu.memory_space<vmem>>, %arg14: memref<2x1x32xf32, #tpu.memory_space<vmem>>, %arg15: memref<2x1x32xf32, #tpu.memory_space<vmem>>, %arg16: memref<32x32xf32, #tpu.memory_space<vmem>>, %arg17: memref<1x32xf32, #tpu.memory_space<vmem>>, %arg18: memref<32x128xf32, #tpu.memory_space<vmem>>, %arg19: memref<1x128xf32, #tpu.memory_space<vmem>>, %arg20: memref<8x128xf32, #tpu.memory_space<vmem>>) attributes {dimension_semantics = [], scalar_prefetch = 0 : i64, scratch_operands = 0 : i64, tpu.core_type = #tpu.core_type<tc>} {
    %c0 = arith.constant 0 : index
    %c0_0 = arith.constant 0 : index
    %0 = vector.load %arg0[%c0, %c0_0] : memref<16x32xf32, #tpu.memory_space<vmem>>, vector<16x32xf32>
    %c0_1 = arith.constant 0 : index
    %c0_2 = arith.constant 0 : index
    %1 = vector.load %arg1[%c0_1, %c0_2] : memref<1x32xf32, #tpu.memory_space<vmem>>, vector<1x32xf32>
    %c0_3 = arith.constant 0 : index
    %c0_4 = arith.constant 0 : index
    %2 = vector.load %arg2[%c0_3, %c0_4] : memref<1x32xf32, #tpu.memory_space<vmem>>, vector<1x32xf32>
    %cst = arith.constant dense<0.000000e+00> : vector<16xf32>
    %3 = vector.multi_reduction <add>, %0, %cst [1] : vector<16x32xf32> to vector<16xf32>
    %4 = vector.shape_cast %3 : vector<16xf32> to vector<16x1xf32>
    %cst_5 = arith.constant 3.200000e+01 : f32
    %5 = vector.broadcast %cst_5 : f32 to vector<16x1xf32>
    %6 = arith.divf %4, %5 : vector<16x1xf32>
    %7 = vector.broadcast %6 : vector<16x1xf32> to vector<16x32xf32>
    %8 = arith.subf %0, %7 : vector<16x32xf32>
    %9 = arith.mulf %8, %8 : vector<16x32xf32>
    %cst_6 = arith.constant dense<0.000000e+00> : vector<16xf32>
    %10 = vector.multi_reduction <add>, %9, %cst_6 [1] : vector<16x32xf32> to vector<16xf32>
    %11 = vector.shape_cast %10 : vector<16xf32> to vector<16x1xf32>
    %cst_7 = arith.constant 3.200000e+01 : f32
    %12 = vector.broadcast %cst_7 : f32 to vector<16x1xf32>
    %13 = arith.divf %11, %12 : vector<16x1xf32>
    %cst_8 = arith.constant 9.99999996E-13 : f32
    %14 = vector.broadcast %cst_8 : f32 to vector<16x1xf32>
    %15 = arith.addf %13, %14 : vector<16x1xf32>
    %16 = math.rsqrt %15 : vector<16x1xf32>
    %17 = vector.broadcast %16 : vector<16x1xf32> to vector<16x32xf32>
    %18 = arith.mulf %8, %17 : vector<16x32xf32>
    %19 = vector.broadcast %1 : vector<1x32xf32> to vector<16x32xf32>
    %20 = arith.mulf %18, %19 : vector<16x32xf32>
    %21 = vector.broadcast %2 : vector<1x32xf32> to vector<16x32xf32>
    %22 = arith.addf %20, %21 : vector<16x32xf32>
    %c0_9 = arith.constant 0 : index
    %c0_10 = arith.constant 0 : index
    %23 = vector.load %arg3[%c0_9, %c0_10] : memref<16x16xf32, #tpu.memory_space<vmem>>, vector<16x16xf32>
    %c0_11 = arith.constant 0 : index
    %c0_12 = arith.constant 0 : index
    %c0_13 = arith.constant 0 : index
    %24 = vector.load %arg4[%c0_11, %c0_12, %c0_13] : memref<2x32x96xf32, #tpu.memory_space<vmem>>, vector<1x32x96xf32>
    %25 = vector.shape_cast %24 : vector<1x32x96xf32> to vector<32x96xf32>
    %cst_14 = arith.constant dense<0.000000e+00> : vector<16x96xf32>
    %26 = tpu.matmul %22, %25, %cst_14 {dimension_numbers = #tpu.dot_dimension_numbers<[1], [0], [0], [1], [0, 0, 1, 1], [], []>} : vector<16x32xf32>, vector<32x96xf32>, vector<16x96xf32> -> vector<16x96xf32>
    %c0_15 = arith.constant 0 : index
    %c0_16 = arith.constant 0 : index
    %c0_17 = arith.constant 0 : index
    %27 = vector.load %arg5[%c0_15, %c0_16, %c0_17] : memref<2x1x96xf32, #tpu.memory_space<vmem>>, vector<1x1x96xf32>
    %28 = vector.shape_cast %27 : vector<1x1x96xf32> to vector<1x96xf32>
    %29 = vector.broadcast %28 : vector<1x96xf32> to vector<16x96xf32>
    %30 = arith.addf %26, %29 : vector<16x96xf32>
    %c0_18 = arith.constant 0 : index
    %c0_19 = arith.constant 0 : index
    %c0_20 = arith.constant 0 : index
    %31 = vector.load %arg6[%c0_18, %c0_19, %c0_20] : memref<2x32x32xf32, #tpu.memory_space<vmem>>, vector<1x32x32xf32>
    %32 = vector.shape_cast %31 : vector<1x32x32xf32> to vector<32x32xf32>
    %33 = vector.extract_strided_slice %30 {offsets = [0, 0], sizes = [16, 16], strides = [1, 1]} : vector<16x96xf32> to vector<16x16xf32>
    %34 = vector.extract_strided_slice %30 {offsets = [0, 32], sizes = [16, 16], strides = [1, 1]} : vector<16x96xf32> to vector<16x16xf32>
    %35 = vector.extract_strided_slice %30 {offsets = [0, 64], sizes = [16, 16], strides = [1, 1]} : vector<16x96xf32> to vector<16x16xf32>
    %cst_21 = arith.constant dense<0.000000e+00> : vector<16x16xf32>
    %36 = tpu.matmul %33, %34, %cst_21 {dimension_numbers = #tpu.dot_dimension_numbers<[1], [1], [0], [0], [0, 0, 1, 0], [], []>} : vector<16x16xf32>, vector<16x16xf32>, vector<16x16xf32> -> vector<16x16xf32>
    %37 = arith.addf %36, %23 : vector<16x16xf32>
    %cst_22 = arith.constant dense<0xFF800000> : vector<16xf32>
    %38 = vector.multi_reduction <maximumf>, %37, %cst_22 [1] : vector<16x16xf32> to vector<16xf32>
    %39 = vector.shape_cast %38 : vector<16xf32> to vector<16x1xf32>
    %40 = vector.broadcast %39 : vector<16x1xf32> to vector<16x16xf32>
    %41 = arith.subf %37, %40 : vector<16x16xf32>
    %42 = math.exp %41 : vector<16x16xf32>
    %cst_23 = arith.constant dense<0.000000e+00> : vector<16xf32>
    %43 = vector.multi_reduction <add>, %42, %cst_23 [1] : vector<16x16xf32> to vector<16xf32>
    %44 = vector.shape_cast %43 : vector<16xf32> to vector<16x1xf32>
    %45 = vector.broadcast %44 : vector<16x1xf32> to vector<16x16xf32>
    %46 = arith.divf %42, %45 : vector<16x16xf32>
    %cst_24 = arith.constant dense<0.000000e+00> : vector<16x16xf32>
    %47 = tpu.matmul %46, %35, %cst_24 {dimension_numbers = #tpu.dot_dimension_numbers<[1], [0], [0], [1], [0, 0, 1, 1], [], []>} : vector<16x16xf32>, vector<16x16xf32>, vector<16x16xf32> -> vector<16x16xf32>
    %48 = vector.extract_strided_slice %32 {offsets = [0, 0], sizes = [16, 32], strides = [1, 1]} : vector<32x32xf32> to vector<16x32xf32>
    %cst_25 = arith.constant dense<0.000000e+00> : vector<16x32xf32>
    %49 = tpu.matmul %47, %48, %cst_25 {dimension_numbers = #tpu.dot_dimension_numbers<[1], [0], [0], [1], [0, 0, 1, 1], [], []>} : vector<16x16xf32>, vector<16x32xf32>, vector<16x32xf32> -> vector<16x32xf32>
    %50 = vector.extract_strided_slice %30 {offsets = [0, 16], sizes = [16, 16], strides = [1, 1]} : vector<16x96xf32> to vector<16x16xf32>
    %51 = vector.extract_strided_slice %30 {offsets = [0, 48], sizes = [16, 16], strides = [1, 1]} : vector<16x96xf32> to vector<16x16xf32>
    %52 = vector.extract_strided_slice %30 {offsets = [0, 80], sizes = [16, 16], strides = [1, 1]} : vector<16x96xf32> to vector<16x16xf32>
    %cst_26 = arith.constant dense<0.000000e+00> : vector<16x16xf32>
    %53 = tpu.matmul %50, %51, %cst_26 {dimension_numbers = #tpu.dot_dimension_numbers<[1], [1], [0], [0], [0, 0, 1, 0], [], []>} : vector<16x16xf32>, vector<16x16xf32>, vector<16x16xf32> -> vector<16x16xf32>
    %54 = arith.addf %53, %23 : vector<16x16xf32>
    %cst_27 = arith.constant dense<0xFF800000> : vector<16xf32>
    %55 = vector.multi_reduction <maximumf>, %54, %cst_27 [1] : vector<16x16xf32> to vector<16xf32>
    %56 = vector.shape_cast %55 : vector<16xf32> to vector<16x1xf32>
    %57 = vector.broadcast %56 : vector<16x1xf32> to vector<16x16xf32>
    %58 = arith.subf %54, %57 : vector<16x16xf32>
    %59 = math.exp %58 : vector<16x16xf32>
    %cst_28 = arith.constant dense<0.000000e+00> : vector<16xf32>
    %60 = vector.multi_reduction <add>, %59, %cst_28 [1] : vector<16x16xf32> to vector<16xf32>
    %61 = vector.shape_cast %60 : vector<16xf32> to vector<16x1xf32>
    %62 = vector.broadcast %61 : vector<16x1xf32> to vector<16x16xf32>
    %63 = arith.divf %59, %62 : vector<16x16xf32>
    %cst_29 = arith.constant dense<0.000000e+00> : vector<16x16xf32>
    %64 = tpu.matmul %63, %52, %cst_29 {dimension_numbers = #tpu.dot_dimension_numbers<[1], [0], [0], [1], [0, 0, 1, 1], [], []>} : vector<16x16xf32>, vector<16x16xf32>, vector<16x16xf32> -> vector<16x16xf32>
    %65 = vector.extract_strided_slice %32 {offsets = [16, 0], sizes = [16, 32], strides = [1, 1]} : vector<32x32xf32> to vector<16x32xf32>
    %cst_30 = arith.constant dense<0.000000e+00> : vector<16x32xf32>
    %66 = tpu.matmul %64, %65, %cst_30 {dimension_numbers = #tpu.dot_dimension_numbers<[1], [0], [0], [1], [0, 0, 1, 1], [], []>} : vector<16x16xf32>, vector<16x32xf32>, vector<16x32xf32> -> vector<16x32xf32>
    %67 = arith.addf %49, %66 : vector<16x32xf32>
    %c0_31 = arith.constant 0 : index
    %c0_32 = arith.constant 0 : index
    %c0_33 = arith.constant 0 : index
    %68 = vector.load %arg7[%c0_31, %c0_32, %c0_33] : memref<2x1x32xf32, #tpu.memory_space<vmem>>, vector<1x1x32xf32>
    %69 = vector.shape_cast %68 : vector<1x1x32xf32> to vector<1x32xf32>
    %70 = vector.broadcast %69 : vector<1x32xf32> to vector<16x32xf32>
    %71 = arith.addf %67, %70 : vector<16x32xf32>
    %72 = arith.addf %71, %22 : vector<16x32xf32>
    %c0_34 = arith.constant 0 : index
    %c0_35 = arith.constant 0 : index
    %c0_36 = arith.constant 0 : index
    %73 = vector.load %arg8[%c0_34, %c0_35, %c0_36] : memref<2x1x32xf32, #tpu.memory_space<vmem>>, vector<1x1x32xf32>
    %74 = vector.shape_cast %73 : vector<1x1x32xf32> to vector<1x32xf32>
    %c0_37 = arith.constant 0 : index
    %c0_38 = arith.constant 0 : index
    %c0_39 = arith.constant 0 : index
    %75 = vector.load %arg9[%c0_37, %c0_38, %c0_39] : memref<2x1x32xf32, #tpu.memory_space<vmem>>, vector<1x1x32xf32>
    %76 = vector.shape_cast %75 : vector<1x1x32xf32> to vector<1x32xf32>
    %cst_40 = arith.constant dense<0.000000e+00> : vector<16xf32>
    %77 = vector.multi_reduction <add>, %72, %cst_40 [1] : vector<16x32xf32> to vector<16xf32>
    %78 = vector.shape_cast %77 : vector<16xf32> to vector<16x1xf32>
    %cst_41 = arith.constant 3.200000e+01 : f32
    %79 = vector.broadcast %cst_41 : f32 to vector<16x1xf32>
    %80 = arith.divf %78, %79 : vector<16x1xf32>
    %81 = vector.broadcast %80 : vector<16x1xf32> to vector<16x32xf32>
    %82 = arith.subf %72, %81 : vector<16x32xf32>
    %83 = arith.mulf %82, %82 : vector<16x32xf32>
    %cst_42 = arith.constant dense<0.000000e+00> : vector<16xf32>
    %84 = vector.multi_reduction <add>, %83, %cst_42 [1] : vector<16x32xf32> to vector<16xf32>
    %85 = vector.shape_cast %84 : vector<16xf32> to vector<16x1xf32>
    %cst_43 = arith.constant 3.200000e+01 : f32
    %86 = vector.broadcast %cst_43 : f32 to vector<16x1xf32>
    %87 = arith.divf %85, %86 : vector<16x1xf32>
    %cst_44 = arith.constant 9.99999996E-13 : f32
    %88 = vector.broadcast %cst_44 : f32 to vector<16x1xf32>
    %89 = arith.addf %87, %88 : vector<16x1xf32>
    %90 = math.rsqrt %89 : vector<16x1xf32>
    %91 = vector.broadcast %90 : vector<16x1xf32> to vector<16x32xf32>
    %92 = arith.mulf %82, %91 : vector<16x32xf32>
    %93 = vector.broadcast %74 : vector<1x32xf32> to vector<16x32xf32>
    %94 = arith.mulf %92, %93 : vector<16x32xf32>
    %95 = vector.broadcast %76 : vector<1x32xf32> to vector<16x32xf32>
    %96 = arith.addf %94, %95 : vector<16x32xf32>
    %c0_45 = arith.constant 0 : index
    %c0_46 = arith.constant 0 : index
    %c0_47 = arith.constant 0 : index
    %97 = vector.load %arg10[%c0_45, %c0_46, %c0_47] : memref<2x32x64xf32, #tpu.memory_space<vmem>>, vector<1x32x64xf32>
    %98 = vector.shape_cast %97 : vector<1x32x64xf32> to vector<32x64xf32>
    %cst_48 = arith.constant dense<0.000000e+00> : vector<16x64xf32>
    %99 = tpu.matmul %96, %98, %cst_48 {dimension_numbers = #tpu.dot_dimension_numbers<[1], [0], [0], [1], [0, 0, 1, 1], [], []>} : vector<16x32xf32>, vector<32x64xf32>, vector<16x64xf32> -> vector<16x64xf32>
    %c0_49 = arith.constant 0 : index
    %c0_50 = arith.constant 0 : index
    %c0_51 = arith.constant 0 : index
    %100 = vector.load %arg11[%c0_49, %c0_50, %c0_51] : memref<2x1x64xf32, #tpu.memory_space<vmem>>, vector<1x1x64xf32>
    %101 = vector.shape_cast %100 : vector<1x1x64xf32> to vector<1x64xf32>
    %102 = vector.broadcast %101 : vector<1x64xf32> to vector<16x64xf32>
    %103 = arith.addf %99, %102 : vector<16x64xf32>
    %cst_52 = arith.constant 5.000000e-01 : f32
    %104 = vector.broadcast %cst_52 : f32 to vector<16x64xf32>
    %105 = arith.mulf %104, %103 : vector<16x64xf32>
    %cst_53 = arith.constant 4.471500e-02 : f32
    %106 = vector.broadcast %cst_53 : f32 to vector<16x64xf32>
    %107 = arith.mulf %106, %103 : vector<16x64xf32>
    %108 = arith.mulf %107, %103 : vector<16x64xf32>
    %109 = arith.mulf %108, %103 : vector<16x64xf32>
    %110 = arith.addf %103, %109 : vector<16x64xf32>
    %cst_54 = arith.constant 0.797884583 : f32
    %111 = vector.broadcast %cst_54 : f32 to vector<16x64xf32>
    %112 = arith.mulf %111, %110 : vector<16x64xf32>
    %113 = math.tanh %112 : vector<16x64xf32>
    %cst_55 = arith.constant 1.000000e+00 : f32
    %114 = vector.broadcast %cst_55 : f32 to vector<16x64xf32>
    %115 = arith.addf %114, %113 : vector<16x64xf32>
    %116 = arith.mulf %105, %115 : vector<16x64xf32>
    %c0_56 = arith.constant 0 : index
    %c0_57 = arith.constant 0 : index
    %c0_58 = arith.constant 0 : index
    %117 = vector.load %arg12[%c0_56, %c0_57, %c0_58] : memref<2x64x32xf32, #tpu.memory_space<vmem>>, vector<1x64x32xf32>
    %118 = vector.shape_cast %117 : vector<1x64x32xf32> to vector<64x32xf32>
    %cst_59 = arith.constant dense<0.000000e+00> : vector<16x32xf32>
    %119 = tpu.matmul %116, %118, %cst_59 {dimension_numbers = #tpu.dot_dimension_numbers<[1], [0], [0], [1], [0, 0, 1, 1], [], []>} : vector<16x64xf32>, vector<64x32xf32>, vector<16x32xf32> -> vector<16x32xf32>
    %c0_60 = arith.constant 0 : index
    %c0_61 = arith.constant 0 : index
    %c0_62 = arith.constant 0 : index
    %120 = vector.load %arg13[%c0_60, %c0_61, %c0_62] : memref<2x1x32xf32, #tpu.memory_space<vmem>>, vector<1x1x32xf32>
    %121 = vector.shape_cast %120 : vector<1x1x32xf32> to vector<1x32xf32>
    %122 = vector.broadcast %121 : vector<1x32xf32> to vector<16x32xf32>
    %123 = arith.addf %119, %122 : vector<16x32xf32>
    %124 = arith.addf %123, %96 : vector<16x32xf32>
    %c0_63 = arith.constant 0 : index
    %c0_64 = arith.constant 0 : index
    %c0_65 = arith.constant 0 : index
    %125 = vector.load %arg14[%c0_63, %c0_64, %c0_65] : memref<2x1x32xf32, #tpu.memory_space<vmem>>, vector<1x1x32xf32>
    %126 = vector.shape_cast %125 : vector<1x1x32xf32> to vector<1x32xf32>
    %c0_66 = arith.constant 0 : index
    %c0_67 = arith.constant 0 : index
    %c0_68 = arith.constant 0 : index
    %127 = vector.load %arg15[%c0_66, %c0_67, %c0_68] : memref<2x1x32xf32, #tpu.memory_space<vmem>>, vector<1x1x32xf32>
    %128 = vector.shape_cast %127 : vector<1x1x32xf32> to vector<1x32xf32>
    %cst_69 = arith.constant dense<0.000000e+00> : vector<16xf32>
    %129 = vector.multi_reduction <add>, %124, %cst_69 [1] : vector<16x32xf32> to vector<16xf32>
    %130 = vector.shape_cast %129 : vector<16xf32> to vector<16x1xf32>
    %cst_70 = arith.constant 3.200000e+01 : f32
    %131 = vector.broadcast %cst_70 : f32 to vector<16x1xf32>
    %132 = arith.divf %130, %131 : vector<16x1xf32>
    %133 = vector.broadcast %132 : vector<16x1xf32> to vector<16x32xf32>
    %134 = arith.subf %124, %133 : vector<16x32xf32>
    %135 = arith.mulf %134, %134 : vector<16x32xf32>
    %cst_71 = arith.constant dense<0.000000e+00> : vector<16xf32>
    %136 = vector.multi_reduction <add>, %135, %cst_71 [1] : vector<16x32xf32> to vector<16xf32>
    %137 = vector.shape_cast %136 : vector<16xf32> to vector<16x1xf32>
    %cst_72 = arith.constant 3.200000e+01 : f32
    %138 = vector.broadcast %cst_72 : f32 to vector<16x1xf32>
    %139 = arith.divf %137, %138 : vector<16x1xf32>
    %cst_73 = arith.constant 9.99999996E-13 : f32
    %140 = vector.broadcast %cst_73 : f32 to vector<16x1xf32>
    %141 = arith.addf %139, %140 : vector<16x1xf32>
    %142 = math.rsqrt %141 : vector<16x1xf32>
    %143 = vector.broadcast %142 : vector<16x1xf32> to vector<16x32xf32>
    %144 = arith.mulf %134, %143 : vector<16x32xf32>
    %145 = vector.broadcast %126 : vector<1x32xf32> to vector<16x32xf32>
    %146 = arith.mulf %144, %145 : vector<16x32xf32>
    %147 = vector.broadcast %128 : vector<1x32xf32> to vector<16x32xf32>
    %148 = arith.addf %146, %147 : vector<16x32xf32>
    %c1 = arith.constant 1 : index
    %c0_74 = arith.constant 0 : index
    %c0_75 = arith.constant 0 : index
    %149 = vector.load %arg4[%c1, %c0_74, %c0_75] : memref<2x32x96xf32, #tpu.memory_space<vmem>>, vector<1x32x96xf32>
    %150 = vector.shape_cast %149 : vector<1x32x96xf32> to vector<32x96xf32>
    %cst_76 = arith.constant dense<0.000000e+00> : vector<16x96xf32>
    %151 = tpu.matmul %148, %150, %cst_76 {dimension_numbers = #tpu.dot_dimension_numbers<[1], [0], [0], [1], [0, 0, 1, 1], [], []>} : vector<16x32xf32>, vector<32x96xf32>, vector<16x96xf32> -> vector<16x96xf32>
    %c1_77 = arith.constant 1 : index
    %c0_78 = arith.constant 0 : index
    %c0_79 = arith.constant 0 : index
    %152 = vector.load %arg5[%c1_77, %c0_78, %c0_79] : memref<2x1x96xf32, #tpu.memory_space<vmem>>, vector<1x1x96xf32>
    %153 = vector.shape_cast %152 : vector<1x1x96xf32> to vector<1x96xf32>
    %154 = vector.broadcast %153 : vector<1x96xf32> to vector<16x96xf32>
    %155 = arith.addf %151, %154 : vector<16x96xf32>
    %c1_80 = arith.constant 1 : index
    %c0_81 = arith.constant 0 : index
    %c0_82 = arith.constant 0 : index
    %156 = vector.load %arg6[%c1_80, %c0_81, %c0_82] : memref<2x32x32xf32, #tpu.memory_space<vmem>>, vector<1x32x32xf32>
    %157 = vector.shape_cast %156 : vector<1x32x32xf32> to vector<32x32xf32>
    %158 = vector.extract_strided_slice %155 {offsets = [0, 0], sizes = [16, 16], strides = [1, 1]} : vector<16x96xf32> to vector<16x16xf32>
    %159 = vector.extract_strided_slice %155 {offsets = [0, 32], sizes = [16, 16], strides = [1, 1]} : vector<16x96xf32> to vector<16x16xf32>
    %160 = vector.extract_strided_slice %155 {offsets = [0, 64], sizes = [16, 16], strides = [1, 1]} : vector<16x96xf32> to vector<16x16xf32>
    %cst_83 = arith.constant dense<0.000000e+00> : vector<16x16xf32>
    %161 = tpu.matmul %158, %159, %cst_83 {dimension_numbers = #tpu.dot_dimension_numbers<[1], [1], [0], [0], [0, 0, 1, 0], [], []>} : vector<16x16xf32>, vector<16x16xf32>, vector<16x16xf32> -> vector<16x16xf32>
    %162 = arith.addf %161, %23 : vector<16x16xf32>
    %cst_84 = arith.constant dense<0xFF800000> : vector<16xf32>
    %163 = vector.multi_reduction <maximumf>, %162, %cst_84 [1] : vector<16x16xf32> to vector<16xf32>
    %164 = vector.shape_cast %163 : vector<16xf32> to vector<16x1xf32>
    %165 = vector.broadcast %164 : vector<16x1xf32> to vector<16x16xf32>
    %166 = arith.subf %162, %165 : vector<16x16xf32>
    %167 = math.exp %166 : vector<16x16xf32>
    %cst_85 = arith.constant dense<0.000000e+00> : vector<16xf32>
    %168 = vector.multi_reduction <add>, %167, %cst_85 [1] : vector<16x16xf32> to vector<16xf32>
    %169 = vector.shape_cast %168 : vector<16xf32> to vector<16x1xf32>
    %170 = vector.broadcast %169 : vector<16x1xf32> to vector<16x16xf32>
    %171 = arith.divf %167, %170 : vector<16x16xf32>
    %cst_86 = arith.constant dense<0.000000e+00> : vector<16x16xf32>
    %172 = tpu.matmul %171, %160, %cst_86 {dimension_numbers = #tpu.dot_dimension_numbers<[1], [0], [0], [1], [0, 0, 1, 1], [], []>} : vector<16x16xf32>, vector<16x16xf32>, vector<16x16xf32> -> vector<16x16xf32>
    %173 = vector.extract_strided_slice %157 {offsets = [0, 0], sizes = [16, 32], strides = [1, 1]} : vector<32x32xf32> to vector<16x32xf32>
    %cst_87 = arith.constant dense<0.000000e+00> : vector<16x32xf32>
    %174 = tpu.matmul %172, %173, %cst_87 {dimension_numbers = #tpu.dot_dimension_numbers<[1], [0], [0], [1], [0, 0, 1, 1], [], []>} : vector<16x16xf32>, vector<16x32xf32>, vector<16x32xf32> -> vector<16x32xf32>
    %175 = vector.extract_strided_slice %155 {offsets = [0, 16], sizes = [16, 16], strides = [1, 1]} : vector<16x96xf32> to vector<16x16xf32>
    %176 = vector.extract_strided_slice %155 {offsets = [0, 48], sizes = [16, 16], strides = [1, 1]} : vector<16x96xf32> to vector<16x16xf32>
    %177 = vector.extract_strided_slice %155 {offsets = [0, 80], sizes = [16, 16], strides = [1, 1]} : vector<16x96xf32> to vector<16x16xf32>
    %cst_88 = arith.constant dense<0.000000e+00> : vector<16x16xf32>
    %178 = tpu.matmul %175, %176, %cst_88 {dimension_numbers = #tpu.dot_dimension_numbers<[1], [1], [0], [0], [0, 0, 1, 0], [], []>} : vector<16x16xf32>, vector<16x16xf32>, vector<16x16xf32> -> vector<16x16xf32>
    %179 = arith.addf %178, %23 : vector<16x16xf32>
    %cst_89 = arith.constant dense<0xFF800000> : vector<16xf32>
    %180 = vector.multi_reduction <maximumf>, %179, %cst_89 [1] : vector<16x16xf32> to vector<16xf32>
    %181 = vector.shape_cast %180 : vector<16xf32> to vector<16x1xf32>
    %182 = vector.broadcast %181 : vector<16x1xf32> to vector<16x16xf32>
    %183 = arith.subf %179, %182 : vector<16x16xf32>
    %184 = math.exp %183 : vector<16x16xf32>
    %cst_90 = arith.constant dense<0.000000e+00> : vector<16xf32>
    %185 = vector.multi_reduction <add>, %184, %cst_90 [1] : vector<16x16xf32> to vector<16xf32>
    %186 = vector.shape_cast %185 : vector<16xf32> to vector<16x1xf32>
    %187 = vector.broadcast %186 : vector<16x1xf32> to vector<16x16xf32>
    %188 = arith.divf %184, %187 : vector<16x16xf32>
    %cst_91 = arith.constant dense<0.000000e+00> : vector<16x16xf32>
    %189 = tpu.matmul %188, %177, %cst_91 {dimension_numbers = #tpu.dot_dimension_numbers<[1], [0], [0], [1], [0, 0, 1, 1], [], []>} : vector<16x16xf32>, vector<16x16xf32>, vector<16x16xf32> -> vector<16x16xf32>
    %190 = vector.extract_strided_slice %157 {offsets = [16, 0], sizes = [16, 32], strides = [1, 1]} : vector<32x32xf32> to vector<16x32xf32>
    %cst_92 = arith.constant dense<0.000000e+00> : vector<16x32xf32>
    %191 = tpu.matmul %189, %190, %cst_92 {dimension_numbers = #tpu.dot_dimension_numbers<[1], [0], [0], [1], [0, 0, 1, 1], [], []>} : vector<16x16xf32>, vector<16x32xf32>, vector<16x32xf32> -> vector<16x32xf32>
    %192 = arith.addf %174, %191 : vector<16x32xf32>
    %c1_93 = arith.constant 1 : index
    %c0_94 = arith.constant 0 : index
    %c0_95 = arith.constant 0 : index
    %193 = vector.load %arg7[%c1_93, %c0_94, %c0_95] : memref<2x1x32xf32, #tpu.memory_space<vmem>>, vector<1x1x32xf32>
    %194 = vector.shape_cast %193 : vector<1x1x32xf32> to vector<1x32xf32>
    %195 = vector.broadcast %194 : vector<1x32xf32> to vector<16x32xf32>
    %196 = arith.addf %192, %195 : vector<16x32xf32>
    %197 = arith.addf %196, %148 : vector<16x32xf32>
    %c1_96 = arith.constant 1 : index
    %c0_97 = arith.constant 0 : index
    %c0_98 = arith.constant 0 : index
    %198 = vector.load %arg8[%c1_96, %c0_97, %c0_98] : memref<2x1x32xf32, #tpu.memory_space<vmem>>, vector<1x1x32xf32>
    %199 = vector.shape_cast %198 : vector<1x1x32xf32> to vector<1x32xf32>
    %c1_99 = arith.constant 1 : index
    %c0_100 = arith.constant 0 : index
    %c0_101 = arith.constant 0 : index
    %200 = vector.load %arg9[%c1_99, %c0_100, %c0_101] : memref<2x1x32xf32, #tpu.memory_space<vmem>>, vector<1x1x32xf32>
    %201 = vector.shape_cast %200 : vector<1x1x32xf32> to vector<1x32xf32>
    %cst_102 = arith.constant dense<0.000000e+00> : vector<16xf32>
    %202 = vector.multi_reduction <add>, %197, %cst_102 [1] : vector<16x32xf32> to vector<16xf32>
    %203 = vector.shape_cast %202 : vector<16xf32> to vector<16x1xf32>
    %cst_103 = arith.constant 3.200000e+01 : f32
    %204 = vector.broadcast %cst_103 : f32 to vector<16x1xf32>
    %205 = arith.divf %203, %204 : vector<16x1xf32>
    %206 = vector.broadcast %205 : vector<16x1xf32> to vector<16x32xf32>
    %207 = arith.subf %197, %206 : vector<16x32xf32>
    %208 = arith.mulf %207, %207 : vector<16x32xf32>
    %cst_104 = arith.constant dense<0.000000e+00> : vector<16xf32>
    %209 = vector.multi_reduction <add>, %208, %cst_104 [1] : vector<16x32xf32> to vector<16xf32>
    %210 = vector.shape_cast %209 : vector<16xf32> to vector<16x1xf32>
    %cst_105 = arith.constant 3.200000e+01 : f32
    %211 = vector.broadcast %cst_105 : f32 to vector<16x1xf32>
    %212 = arith.divf %210, %211 : vector<16x1xf32>
    %cst_106 = arith.constant 9.99999996E-13 : f32
    %213 = vector.broadcast %cst_106 : f32 to vector<16x1xf32>
    %214 = arith.addf %212, %213 : vector<16x1xf32>
    %215 = math.rsqrt %214 : vector<16x1xf32>
    %216 = vector.broadcast %215 : vector<16x1xf32> to vector<16x32xf32>
    %217 = arith.mulf %207, %216 : vector<16x32xf32>
    %218 = vector.broadcast %199 : vector<1x32xf32> to vector<16x32xf32>
    %219 = arith.mulf %217, %218 : vector<16x32xf32>
    %220 = vector.broadcast %201 : vector<1x32xf32> to vector<16x32xf32>
    %221 = arith.addf %219, %220 : vector<16x32xf32>
    %c1_107 = arith.constant 1 : index
    %c0_108 = arith.constant 0 : index
    %c0_109 = arith.constant 0 : index
    %222 = vector.load %arg10[%c1_107, %c0_108, %c0_109] : memref<2x32x64xf32, #tpu.memory_space<vmem>>, vector<1x32x64xf32>
    %223 = vector.shape_cast %222 : vector<1x32x64xf32> to vector<32x64xf32>
    %cst_110 = arith.constant dense<0.000000e+00> : vector<16x64xf32>
    %224 = tpu.matmul %221, %223, %cst_110 {dimension_numbers = #tpu.dot_dimension_numbers<[1], [0], [0], [1], [0, 0, 1, 1], [], []>} : vector<16x32xf32>, vector<32x64xf32>, vector<16x64xf32> -> vector<16x64xf32>
    %c1_111 = arith.constant 1 : index
    %c0_112 = arith.constant 0 : index
    %c0_113 = arith.constant 0 : index
    %225 = vector.load %arg11[%c1_111, %c0_112, %c0_113] : memref<2x1x64xf32, #tpu.memory_space<vmem>>, vector<1x1x64xf32>
    %226 = vector.shape_cast %225 : vector<1x1x64xf32> to vector<1x64xf32>
    %227 = vector.broadcast %226 : vector<1x64xf32> to vector<16x64xf32>
    %228 = arith.addf %224, %227 : vector<16x64xf32>
    %cst_114 = arith.constant 5.000000e-01 : f32
    %229 = vector.broadcast %cst_114 : f32 to vector<16x64xf32>
    %230 = arith.mulf %229, %228 : vector<16x64xf32>
    %cst_115 = arith.constant 4.471500e-02 : f32
    %231 = vector.broadcast %cst_115 : f32 to vector<16x64xf32>
    %232 = arith.mulf %231, %228 : vector<16x64xf32>
    %233 = arith.mulf %232, %228 : vector<16x64xf32>
    %234 = arith.mulf %233, %228 : vector<16x64xf32>
    %235 = arith.addf %228, %234 : vector<16x64xf32>
    %cst_116 = arith.constant 0.797884583 : f32
    %236 = vector.broadcast %cst_116 : f32 to vector<16x64xf32>
    %237 = arith.mulf %236, %235 : vector<16x64xf32>
    %238 = math.tanh %237 : vector<16x64xf32>
    %cst_117 = arith.constant 1.000000e+00 : f32
    %239 = vector.broadcast %cst_117 : f32 to vector<16x64xf32>
    %240 = arith.addf %239, %238 : vector<16x64xf32>
    %241 = arith.mulf %230, %240 : vector<16x64xf32>
    %c1_118 = arith.constant 1 : index
    %c0_119 = arith.constant 0 : index
    %c0_120 = arith.constant 0 : index
    %242 = vector.load %arg12[%c1_118, %c0_119, %c0_120] : memref<2x64x32xf32, #tpu.memory_space<vmem>>, vector<1x64x32xf32>
    %243 = vector.shape_cast %242 : vector<1x64x32xf32> to vector<64x32xf32>
    %cst_121 = arith.constant dense<0.000000e+00> : vector<16x32xf32>
    %244 = tpu.matmul %241, %243, %cst_121 {dimension_numbers = #tpu.dot_dimension_numbers<[1], [0], [0], [1], [0, 0, 1, 1], [], []>} : vector<16x64xf32>, vector<64x32xf32>, vector<16x32xf32> -> vector<16x32xf32>
    %c1_122 = arith.constant 1 : index
    %c0_123 = arith.constant 0 : index
    %c0_124 = arith.constant 0 : index
    %245 = vector.load %arg13[%c1_122, %c0_123, %c0_124] : memref<2x1x32xf32, #tpu.memory_space<vmem>>, vector<1x1x32xf32>
    %246 = vector.shape_cast %245 : vector<1x1x32xf32> to vector<1x32xf32>
    %247 = vector.broadcast %246 : vector<1x32xf32> to vector<16x32xf32>
    %248 = arith.addf %244, %247 : vector<16x32xf32>
    %249 = arith.addf %248, %221 : vector<16x32xf32>
    %c1_125 = arith.constant 1 : index
    %c0_126 = arith.constant 0 : index
    %c0_127 = arith.constant 0 : index
    %250 = vector.load %arg14[%c1_125, %c0_126, %c0_127] : memref<2x1x32xf32, #tpu.memory_space<vmem>>, vector<1x1x32xf32>
    %251 = vector.shape_cast %250 : vector<1x1x32xf32> to vector<1x32xf32>
    %c1_128 = arith.constant 1 : index
    %c0_129 = arith.constant 0 : index
    %c0_130 = arith.constant 0 : index
    %252 = vector.load %arg15[%c1_128, %c0_129, %c0_130] : memref<2x1x32xf32, #tpu.memory_space<vmem>>, vector<1x1x32xf32>
    %253 = vector.shape_cast %252 : vector<1x1x32xf32> to vector<1x32xf32>
    %cst_131 = arith.constant dense<0.000000e+00> : vector<16xf32>
    %254 = vector.multi_reduction <add>, %249, %cst_131 [1] : vector<16x32xf32> to vector<16xf32>
    %255 = vector.shape_cast %254 : vector<16xf32> to vector<16x1xf32>
    %cst_132 = arith.constant 3.200000e+01 : f32
    %256 = vector.broadcast %cst_132 : f32 to vector<16x1xf32>
    %257 = arith.divf %255, %256 : vector<16x1xf32>
    %258 = vector.broadcast %257 : vector<16x1xf32> to vector<16x32xf32>
    %259 = arith.subf %249, %258 : vector<16x32xf32>
    %260 = arith.mulf %259, %259 : vector<16x32xf32>
    %cst_133 = arith.constant dense<0.000000e+00> : vector<16xf32>
    %261 = vector.multi_reduction <add>, %260, %cst_133 [1] : vector<16x32xf32> to vector<16xf32>
    %262 = vector.shape_cast %261 : vector<16xf32> to vector<16x1xf32>
    %cst_134 = arith.constant 3.200000e+01 : f32
    %263 = vector.broadcast %cst_134 : f32 to vector<16x1xf32>
    %264 = arith.divf %262, %263 : vector<16x1xf32>
    %cst_135 = arith.constant 9.99999996E-13 : f32
    %265 = vector.broadcast %cst_135 : f32 to vector<16x1xf32>
    %266 = arith.addf %264, %265 : vector<16x1xf32>
    %267 = math.rsqrt %266 : vector<16x1xf32>
    %268 = vector.broadcast %267 : vector<16x1xf32> to vector<16x32xf32>
    %269 = arith.mulf %259, %268 : vector<16x32xf32>
    %270 = vector.broadcast %251 : vector<1x32xf32> to vector<16x32xf32>
    %271 = arith.mulf %269, %270 : vector<16x32xf32>
    %272 = vector.broadcast %253 : vector<1x32xf32> to vector<16x32xf32>
    %273 = arith.addf %271, %272 : vector<16x32xf32>
    %274 = vector.extract_strided_slice %273 {offsets = [0, 0], sizes = [1, 32], strides = [1, 1]} : vector<16x32xf32> to vector<1x32xf32>
    %275 = vector.extract_strided_slice %273 {offsets = [8, 0], sizes = [1, 32], strides = [1, 1]} : vector<16x32xf32> to vector<1x32xf32>
    %276 = tpu.concatenate %274, %275 in 0 : vector<1x32xf32>, vector<1x32xf32> -> vector<2x32xf32>
    %c0_136 = arith.constant 0 : index
    %c0_137 = arith.constant 0 : index
    %277 = vector.load %arg16[%c0_136, %c0_137] : memref<32x32xf32, #tpu.memory_space<vmem>>, vector<32x32xf32>
    %cst_138 = arith.constant dense<0.000000e+00> : vector<2x32xf32>
    %278 = tpu.matmul %276, %277, %cst_138 {dimension_numbers = #tpu.dot_dimension_numbers<[1], [0], [0], [1], [0, 0, 1, 1], [], []>} : vector<2x32xf32>, vector<32x32xf32>, vector<2x32xf32> -> vector<2x32xf32>
    %c0_139 = arith.constant 0 : index
    %c0_140 = arith.constant 0 : index
    %279 = vector.load %arg17[%c0_139, %c0_140] : memref<1x32xf32, #tpu.memory_space<vmem>>, vector<1x32xf32>
    %280 = vector.broadcast %279 : vector<1x32xf32> to vector<2x32xf32>
    %281 = arith.addf %278, %280 : vector<2x32xf32>
    %282 = math.tanh %281 : vector<2x32xf32>
    %c0_141 = arith.constant 0 : index
    %c0_142 = arith.constant 0 : index
    %283 = vector.load %arg18[%c0_141, %c0_142] : memref<32x128xf32, #tpu.memory_space<vmem>>, vector<32x128xf32>
    %cst_143 = arith.constant dense<0.000000e+00> : vector<2x128xf32>
    %284 = tpu.matmul %282, %283, %cst_143 {dimension_numbers = #tpu.dot_dimension_numbers<[1], [0], [0], [1], [0, 0, 1, 1], [], []>} : vector<2x32xf32>, vector<32x128xf32>, vector<2x128xf32> -> vector<2x128xf32>
    %c0_144 = arith.constant 0 : index
    %c0_145 = arith.constant 0 : index
    %285 = vector.load %arg19[%c0_144, %c0_145] : memref<1x128xf32, #tpu.memory_space<vmem>>, vector<1x128xf32>
    %286 = vector.broadcast %285 : vector<1x128xf32> to vector<2x128xf32>
    %287 = arith.addf %284, %286 : vector<2x128xf32>
    %cst_146 = arith.constant 0.000000e+00 : f32
    %288 = vector.broadcast %cst_146 : f32 to vector<6x128xf32>
    %289 = tpu.concatenate %287, %288 in 0 : vector<2x128xf32>, vector<6x128xf32> -> vector<8x128xf32>
    %c0_147 = arith.constant 0 : index
    %c0_148 = arith.constant 0 : index
    %290 = vector.load %arg20[%c0_147, %c0_148] : memref<8x128xf32, #tpu.memory_space<vmem>>, vector<8x128xf32>
    tpu.vector_store %arg20[%c0_147, %c0_148], %289 {strides = array<i32>} : memref<8x128xf32, #tpu.memory_space<vmem>>, vector<8x128xf32>,
    return
  }
}

</mosaic_0001>

<llo_original>
// kernel: mul.8
$region0: #{mul.8}
  %s0 = inlined_call_operand.vmem [shape: f32[2,8], index: 0, kind: input, shape index: {}]
  %s1 = inlined_call_operand.vmem [shape: f32[16], index: 1, kind: output, shape index: {}]
  $region1: #{mul.8} parent=0
    #allocation0 [shape = 'u8[4096]{0}', space=vmem, size = 0x1000, scoped, tag = 'scoped mem for output reshape']
    #allocation1 [shape = 'u8[4096]{0}', space=vmem, size = 0x1000, scoped, tag = 'scoped mem for input reshape']
    %s3 = sshllo.u32 0, 2
    %v4 = vld [vmem:[%s0] sm:%s3]
    %5 = vst [vmem:[#allocation1] sm:%s3] %v4
    %v6 = vld [vmem:[#allocation1] sm:$0x1]
    %vm7 = vcmask 64512
    %8 = vst.msk [vmem:[#allocation0] sm:$0x1] %vm7, %v6
    %s9 = scalar_lea.vmem [#allocation1], 1
    %v10 = vld [vmem:[%s9] sm:$0x1]
    %11 = vrot.lane.b32.xlu0 %v10, 8
    %v12 = vpop.permute.xlu0 %11
    %vm13 = vcmask 130112
    %14 = vst.msk [vmem:[#allocation0] sm:$0x1] %vm13, %v12
    %s16 = sshllo.u32 0, 1
    %v18 = vld [vmem:[#allocation0] sm:%s16]
    %s19 = sshllo.u32 0, 1
    %20 = vst [vmem:[%s1] sm:%s19] %v18

// kernel: bert_clf_forward.1
$region0: #{bert_clf_forward.1}
  #allocation0 [shape = 'u32[]', space=smem, size = 0x4, offset = 0x4, fixed_abs, tag = 'smem constant byte address 0x4 - core index']
  #allocation1 [shape = 'u32[144,128]{1,0:T(1,128)}', space=vmem, size = 0x12000, scoped, tag = 'internal scratch']
  %s0 = inlined_call_operand.vmem [shape: f32[16,32], index: 0, kind: input, shape index: {}]
  %s1 = inlined_call_operand.vmem [shape: f32[1,32], index: 1, kind: input, shape index: {}]
  %s2 = inlined_call_operand.vmem [shape: f32[1,32], index: 2, kind: input, shape index: {}]
  %s3 = inlined_call_operand.vmem [shape: f32[16,16], index: 3, kind: input, shape index: {}]
  %s4 = inlined_call_operand.vmem [shape: f32[2,32,96], index: 4, kind: input, shape index: {}]
  %s5 = inlined_call_operand.vmem [shape: f32[2,1,96], index: 5, kind: input, shape index: {}]
  %s6 = inlined_call_operand.vmem [shape: f32[2,32,32], index: 6, kind: input, shape index: {}]
  %s7 = inlined_call_operand.vmem [shape: f32[2,1,32], index: 7, kind: input, shape index: {}]
  %s8 = inlined_call_operand.vmem [shape: f32[2,1,32], index: 8, kind: input, shape index: {}]
  %s9 = inlined_call_operand.vmem [shape: f32[2,1,32], index: 9, kind: input, shape index: {}]
  %s10 = inlined_call_operand.vmem [shape: f32[2,32,64], index: 10, kind: input, shape index: {}]
  %s11 = inlined_call_operand.vmem [shape: f32[2,1,64], index: 11, kind: input, shape index: {}]
  %s12 = inlined_call_operand.vmem [shape: f32[2,64,32], index: 12, kind: input, shape index: {}]
  %s13 = inlined_call_operand.vmem [shape: f32[2,1,32], index: 13, kind: input, shape index: {}]
  %s14 = inlined_call_operand.vmem [shape: f32[2,1,32], index: 14, kind: input, shape index: {}]
  %s15 = inlined_call_operand.vmem [shape: f32[2,1,32], index: 15, kind: input, shape index: {}]
  %s16 = inlined_call_operand.vmem [shape: f32[32,32], index: 16, kind: input, shape index: {}]
  %s17 = inlined_call_operand.vmem [shape: f32[1,32], index: 17, kind: input, shape index: {}]
  %s18 = inlined_call_operand.vmem [shape: f32[32,128], index: 18, kind: input, shape index: {}]
  %s19 = inlined_call_operand.vmem [shape: f32[1,128], index: 19, kind: input, shape index: {}]
  %s20 = inlined_call_operand.vmem [shape: f32[8,128], index: 20, kind: output, shape index: {}]
  %s21 = sld [smem:[#allocation0]]
  $region90: #{bert_clf_forward.1} parent=0
    _
  %s23 = ssub.s32 1, %s21
  %s24 = scalar_select 0, %s23, %s21
  // Predicated region
  $region2: #{bert_clf_forward.1} parent=0 // pred_check
    _
  $region3: #{bert_clf_forward.1} parent=0 // pred_check_branch
    %26 = sbr.rel (0) target = $region5
  $region4: #{bert_clf_forward.1} parent=0 // pred_region
    _
  $region5: #{bert_clf_forward.1} parent=0 // pred_fallthru
    _
  // Predicated region
  $region6: #{bert_clf_forward.1} parent=0 // pred_check
    _
  $region7: #{bert_clf_forward.1} parent=0 // pred_check_branch
    %28 = sbr.rel (0) target = $region9
  $region8: #{bert_clf_forward.1} parent=0 // pred_region
    _
  $region9: #{bert_clf_forward.1} parent=0 // pred_fallthru
    _
  // Predicated region
  $region10: #{bert_clf_forward.1} parent=0 // pred_check
    _
  $region11: #{bert_clf_forward.1} parent=0 // pred_check_branch
    %30 = sbr.rel (0) target = $region13
  $region12: #{bert_clf_forward.1} parent=0 // pred_region
    _
  $region13: #{bert_clf_forward.1} parent=0 // pred_fallthru
    _
  // Predicated region
  $region14: #{bert_clf_forward.1} parent=0 // pred_check
    _
  $region15: #{bert_clf_forward.1} parent=0 // pred_check_branch
    %32 = sbr.rel (0) target = $region17
  $region16: #{bert_clf_forward.1} parent=0 // pred_region
    _
  $region17: #{bert_clf_forward.1} parent=0 // pred_fallthru
    _
  // Predicated region
  $region18: #{bert_clf_forward.1} parent=0 // pred_check
    _
  $region19: #{bert_clf_forward.1} parent=0 // pred_check_branch
    %34 = sbr.rel (0) target = $region21
  $region20: #{bert_clf_forward.1} parent=0 // pred_region
    _
  $region21: #{bert_clf_forward.1} parent=0 // pred_fallthru
    _
  // Predicated region
  $region22: #{bert_clf_forward.1} parent=0 // pred_check
    _
  $region23: #{bert_clf_forward.1} parent=0 // pred_check_branch
    %36 = sbr.rel (0) target = $region25
  $region24: #{bert_clf_forward.1} parent=0 // pred_region
    _
  $region25: #{bert_clf_forward.1} parent=0 // pred_fallthru
    _
  // Predicated region
  $region26: #{bert_clf_forward.1} parent=0 // pred_check
    _
  $region27: #{bert_clf_forward.1} parent=0 // pred_check_branch
    %38 = sbr.rel (0) target = $region29
  $region28: #{bert_clf_forward.1} parent=0 // pred_region
    _
  $region29: #{bert_clf_forward.1} parent=0 // pred_fallthru
    _
  // Predicated region
  $region30: #{bert_clf_forward.1} parent=0 // pred_check
    _
  $region31: #{bert_clf_forward.1} parent=0 // pred_check_branch
    %40 = sbr.rel (0) target = $region33
  $region32: #{bert_clf_forward.1} parent=0 // pred_region
    _
  $region33: #{bert_clf_forward.1} parent=0 // pred_fallthru
    _
  // Predicated region
  $region34: #{bert_clf_forward.1} parent=0 // pred_check
    _
  $region35: #{bert_clf_forward.1} parent=0 // pred_check_branch
    %42 = sbr.rel (0) target = $region37
  $region36: #{bert_clf_forward.1} parent=0 // pred_region
    _
  $region37: #{bert_clf_forward.1} parent=0 // pred_fallthru
    _
  // Predicated region
  $region38: #{bert_clf_forward.1} parent=0 // pred_check
    _
  $region39: #{bert_clf_forward.1} parent=0 // pred_check_branch
    %44 = sbr.rel (0) target = $region41
  $region40: #{bert_clf_forward.1} parent=0 // pred_region
    _
  $region41: #{bert_clf_forward.1} parent=0 // pred_fallthru
    _
  // Predicated region
  $region42: #{bert_clf_forward.1} parent=0 // pred_check
    _
  $region43: #{bert_clf_forward.1} parent=0 // pred_check_branch
    %46 = sbr.rel (0) target = $region45
  $region44: #{bert_clf_forward.1} parent=0 // pred_region
    _
  $region45: #{bert_clf_forward.1} parent=0 // pred_fallthru
    _
  // Predicated region
  $region46: #{bert_clf_forward.1} parent=0 // pred_check
    _
  $region47: #{bert_clf_forward.1} parent=0 // pred_check_branch
    %48 = sbr.rel (0) target = $region49
  $region48: #{bert_clf_forward.1} parent=0 // pred_region
    _
  $region49: #{bert_clf_forward.1} parent=0 // pred_fallthru
    _
  // Predicated region
  $region50: #{bert_clf_forward.1} parent=0 // pred_check
    _
  $region51: #{bert_clf_forward.1} parent=0 // pred_check_branch
    %50 = sbr.rel (0) target = $region53
  $region52: #{bert_clf_forward.1} parent=0 // pred_region
    _
  $region53: #{bert_clf_forward.1} parent=0 // pred_fallthru
    _
  // Predicated region
  $region54: #{bert_clf_forward.1} parent=0 // pred_check
    _
  $region55: #{bert_clf_forward.1} parent=0 // pred_check_branch
    %52 = sbr.rel (0) target = $region57
  $region56: #{bert_clf_forward.1} parent=0 // pred_region
    _
  $region57: #{bert_clf_forward.1} parent=0 // pred_fallthru
    _
  // Predicated region
  $region58: #{bert_clf_forward.1} parent=0 // pred_check
    _
  $region59: #{bert_clf_forward.1} parent=0 // pred_check_branch
    %54 = sbr.rel (0) target = $region61
  $region60: #{bert_clf_forward.1} parent=0 // pred_region
    _
  $region61: #{bert_clf_forward.1} parent=0 // pred_fallthru
    _
  // Predicated region
  $region62: #{bert_clf_forward.1} parent=0 // pred_check
    _
  $region63: #{bert_clf_forward.1} parent=0 // pred_check_branch
    %56 = sbr.rel (0) target = $region65
  $region64: #{bert_clf_forward.1} parent=0 // pred_region
    _
  $region65: #{bert_clf_forward.1} parent=0 // pred_fallthru
    _
  // Predicated region
  $region66: #{bert_clf_forward.1} parent=0 // pred_check
    _
  $region67: #{bert_clf_forward.1} parent=0 // pred_check_branch
    %58 = sbr.rel (0) target = $region69
  $region68: #{bert_clf_forward.1} parent=0 // pred_region
    _
  $region69: #{bert_clf_forward.1} parent=0 // pred_fallthru
    _
  // Predicated region
  $region70: #{bert_clf_forward.1} parent=0 // pred_check
    _
  $region71: #{bert_clf_forward.1} parent=0 // pred_check_branch
    %60 = sbr.rel (0) target = $region73
  $region72: #{bert_clf_forward.1} parent=0 // pred_region
    _
  $region73: #{bert_clf_forward.1} parent=0 // pred_fallthru
    _
  // Predicated region
  $region74: #{bert_clf_forward.1} parent=0 // pred_check
    _
  $region75: #{bert_clf_forward.1} parent=0 // pred_check_branch
    %62 = sbr.rel (0) target = $region77
  $region76: #{bert_clf_forward.1} parent=0 // pred_region
    _
  $region77: #{bert_clf_forward.1} parent=0 // pred_fallthru
    _
  // Predicated region
  $region78: #{bert_clf_forward.1} parent=0 // pred_check
    _
  $region79: #{bert_clf_forward.1} parent=0 // pred_check_branch
    %64 = sbr.rel (0) target = $region81
  $region80: #{bert_clf_forward.1} parent=0 // pred_region
    _
  $region81: #{bert_clf_forward.1} parent=0 // pred_fallthru
    _
  %v65 = vld [vmem:[%s0] sm:$0xff]
  %v66 = vld [vmem:[%s0 + $0x8] sm:$0xff]
  %v67 = vld [vmem:[%s1] sm:$0x1]
  %v68 = vld [vmem:[%s2] sm:$0x1]
  %vm69 = vcmask 261120
  %v70 = vsel %vm69, %v65, 0.0
  %71 = vadd.xlane.f32.xlu0 %v70
  %v72 = vpop.xlane.xlu0 %71
  %v73 = vsel %vm69, %v66, 0.0
  %74 = vadd.xlane.f32.xlu0 %v73
  %v75 = vpop.xlane.xlu0 %74
  %v76 = vrcp.pop 32.0
  %v77 = vmul.f32 %v72, %v76
  %v78 = vmul.f32 %v75, %v76
  %v79 = vsub.f32 %v65, %v77
  %v80 = vsub.f32 %v66, %v78
  %v81 = vmul.f32 %v79, %v79
  %v82 = vmul.f32 %v80, %v80
  %v83 = vsel %vm69, %v81, 0.0
  %84 = vadd.xlane.f32.xlu0 %v83
  %v85 = vpop.xlane.xlu0 %84
  %v86 = vsel %vm69, %v82, 0.0
  %87 = vadd.xlane.f32.xlu0 %v86
  %v88 = vpop.xlane.xlu0 %87
  %v89 = vmul.f32 %v85, %v76
  %v90 = vmul.f32 %v88, %v76
  %v91 = vadd.f32 %v89, 1e-12
  %v92 = vadd.f32 %v90, 1e-12
  %v93 = vrsqrt.pop %v91
  %v94 = vrsqrt.pop %v92
  %v95 = vmul.f32 %v79, %v93
  %v96 = vmul.f32 %v80, %v94
  %v98 = vlaneseq
  %v99 = vshrl.u32 %v98, 7
  %v100 = vsub.s32 0, %v99
  %v101 = vrot.slane %v67, %v100
  %v103 = vmul.f32 %v95, %v101
  %v104 = vmul.f32 %v96, %v101
  %v106 = vlaneseq
  %v107 = vshrl.u32 %v106, 7
  %v108 = vsub.s32 0, %v107
  %v109 = vrot.slane %v68, %v108
  %v111 = vadd.f32 %v103, %v109
  %v112 = vadd.f32 %v104, %v109
  %v113 = vld [vmem:[%s3] sm:$0xff]
  %v114 = vld [vmem:[%s3 + $0x8] sm:$0xff]
  %v115 = vld [vmem:[%s4] sm:$0xff]
  %v116 = vld [vmem:[%s4 + $0x8] sm:$0xff]
  %v117 = vld [vmem:[%s4 + $0x10] sm:$0xff]
  %v118 = vld [vmem:[%s4 + $0x18] sm:$0xff]
  %v119 = vld [vmem:[%s5] sm:$0x1]
  %v121 = vlaneseq
  %v122 = vshrl.u32 %v121, 7
  %v123 = vsub.s32 0, %v122
  %v124 = vrot.slane %v119, %v123
  %v127 = vsel %vm69, %v111, 0
  %v130 = vsel %vm69, %v112, 0
  %132 = vmatprep.subr.mxu0 0.0
  %133 = vmatpush1.msra.mxu0 %v115
  %134 = vmatprep.subr.mxu0 0.0
  %135 = vmatpush1.msra.mxu0 %v116
  %136 = vmatprep.subr.mxu0 0.0
  %137 = vmatpush1.msra.mxu0 %v117
  %138 = vmatprep.subr.mxu0 0.0
  %139 = vmatpush1.msra.mxu0 %v118
  %140 = vmatprep.subr.mxu0 0.0
  %141 = vmatpush1.msra.mxu0 0.0
  %142 = vmatprep.subr.mxu0 0.0
  %143 = vmatpush1.msra.mxu0 0.0
  %144 = vmatprep.subr.mxu0 0.0
  %145 = vmatpush1.msra.mxu0 0.0
  %146 = vmatprep.subr.mxu0 0.0
  %147 = vmatpush1.msra.mxu0 0.0
  %148 = vmatprep.subr.mxu0 0.0
  %149 = vmatpush1.msra.mxu0 0.0
  %150 = vmatprep.subr.mxu0 0.0
  %151 = vmatpush1.msra.mxu0 0.0
  %152 = vmatprep.subr.mxu0 0.0
  %153 = vmatpush1.msra.mxu0 0.0
  %154 = vmatprep.subr.mxu0 0.0
  %155 = vmatpush1.msra.mxu0 0.0
  %156 = vmatprep.subr.mxu0 0.0
  %157 = vmatpush1.msra.mxu0 0.0
  %158 = vmatprep.subr.mxu0 0.0
  %159 = vmatpush1.msra.mxu0 0.0
  %160 = vmatprep.subr.mxu0 0.0
  %161 = vmatpush1.msra.mxu0 0.0
  %162 = vmatprep.subr.mxu0 0.0
  %163 = vmatpush1.msra.mxu0 0.0
  %164 = vmatprep.subr.mxu0 0.0
  %165 = vmatpush1.msra.mxu0 0.0
  %166 = vmatprep.subr.mxu0 0.0
  %167 = vmatpush1.msra.mxu0 0.0
  %168 = vmatprep.subr.mxu0 0.0
  %169 = vmatpush1.msra.mxu0 0.0
  %170 = vmatprep.subr.mxu0 0.0
  %171 = vmatpush1.msra.mxu0 0.0
  %172 = vmatprep.subr.mxu0 0.0
  %173 = vmatpush1.msra.mxu0 0.0
  %174 = vmatprep.subr.mxu0 0.0
  %175 = vmatpush1.msra.mxu0 0.0
  %176 = vmatprep.subr.mxu0 0.0
  %177 = vmatpush1.msra.mxu0 0.0
  %178 = vmatprep.subr.mxu0 0.0
  %179 = vmatpush1.msra.mxu0 0.0
  %180 = vmatprep.subr.mxu0 0.0
  %181 = vmatpush1.msra.mxu0 0.0
  %182 = vmatprep.subr.mxu0 0.0
  %183 = vmatpush1.msra.mxu0 0.0
  %184 = vmatprep.subr.mxu0 0.0
  %185 = vmatpush1.msra.mxu0 0.0
  %186 = vmatprep.subr.mxu0 0.0
  %187 = vmatpush1.msra.mxu0 0.0
  %188 = vmatprep.subr.mxu0 0.0
  %189 = vmatpush1.msra.mxu0 0.0
  %190 = vmatprep.subr.mxu0 0.0
  %191 = vmatpush1.msra.mxu0 0.0
  %192 = vmatprep.subr.mxu0 0.0
  %193 = vmatpush1.msra.mxu0 0.0
  %194 = vmatprep.subr.mxu0 0.0
  %195 = vmatpush1.msra.mxu0 0.0
  %196 = vmatprep.mubr.f32.mxu0 0.0
  %197 = vmatmul.mubr.f32.gmra.mrb[0].mxu0 %v127
  %v198 = vpop.f32.mrb[0].mxu0
  %v199 = vadd.f32 %v124, %v198
  %v200 = vpop.f32.mrb[0].mxu0
  %201 = vmatprep.mubr.f32.mxu0 0.0
  %202 = vmatmul.mubr.f32.gmra.mrb[0].mxu0 %v130
  %v203 = vpop.f32.mrb[0].mxu0
  %v204 = vadd.f32 %v124, %v203
  %v205 = vpop.f32.mrb[0].mxu0
  %206 = vdwg.mxu0
  %v207 = vld [vmem:[%s6] sm:$0xff]
  %v208 = vld [vmem:[%s6 + $0x8] sm:$0xff]
  %v209 = vld [vmem:[%s6 + $0x10] sm:$0xff]
  %v210 = vld [vmem:[%s6 + $0x18] sm:$0xff]
  %213 = vrot.lane.b32.xlu0 %v199, 96
  %v214 = vpop.permute.xlu0 %213
  %215 = vrot.lane.b32.xlu0 %v204, 96
  %v216 = vpop.permute.xlu0 %215
  %vm217 = vcmask 130048
  %v218 = vsel %vm217, %v199, 0
  %v220 = vsel %vm217, %v204, 0
  %v222 = vsel %vm217, %v214, 0
  %v224 = vsel %vm217, %v216, 0
  %226 = vmatprep.subr.mxu0 0.0
  %227 = vmatpush1.xpose.msra.mxu0 %v222
  %228 = vmatprep.subr.mxu0 0.0
  %229 = vmatpush1.xpose.msra.mxu0 %v224
  %230 = vmatprep.subr.mxu0 0.0
  %231 = vmatpush1.xpose.msra.mxu0 0.0
  %232 = vmatprep.subr.mxu0 0.0
  %233 = vmatpush1.xpose.msra.mxu0 0.0
  %234 = vmatprep.subr.mxu0 0.0
  %235 = vmatpush1.xpose.msra.mxu0 0.0
  %236 = vmatprep.subr.mxu0 0.0
  %237 = vmatpush1.xpose.msra.mxu0 0.0
  %238 = vmatprep.subr.mxu0 0.0
  %239 = vmatpush1.xpose.msra.mxu0 0.0
  %240 = vmatprep.subr.mxu0 0.0
  %241 = vmatpush1.xpose.msra.mxu0 0.0
  %242 = vmatprep.subr.mxu0 0.0
  %243 = vmatpush1.xpose.msra.mxu0 0.0
  %244 = vmatprep.subr.mxu0 0.0
  %245 = vmatpush1.xpose.msra.mxu0 0.0
  %246 = vmatprep.subr.mxu0 0.0
  %247 = vmatpush1.xpose.msra.mxu0 0.0
  %248 = vmatprep.subr.mxu0 0.0
  %249 = vmatpush1.xpose.msra.mxu0 0.0
  %250 = vmatprep.subr.mxu0 0.0
  %251 = vmatpush1.xpose.msra.mxu0 0.0
  %252 = vmatprep.subr.mxu0 0.0
  %253 = vmatpush1.xpose.msra.mxu0 0.0
  %254 = vmatprep.subr.mxu0 0.0
  %255 = vmatpush1.xpose.msra.mxu0 0.0
  %256 = vmatprep.subr.mxu0 0.0
  %257 = vmatpush1.xpose.msra.mxu0 0.0
  %258 = vmatprep.subr.mxu0 0.0
  %259 = vmatpush1.xpose.msra.mxu0 0.0
  %260 = vmatprep.subr.mxu0 0.0
  %261 = vmatpush1.xpose.msra.mxu0 0.0
  %262 = vmatprep.subr.mxu0 0.0
  %263 = vmatpush1.xpose.msra.mxu0 0.0
  %264 = vmatprep.subr.mxu0 0.0
  %265 = vmatpush1.xpose.msra.mxu0 0.0
  %266 = vmatprep.subr.mxu0 0.0
  %267 = vmatpush1.xpose.msra.mxu0 0.0
  %268 = vmatprep.subr.mxu0 0.0
  %269 = vmatpush1.xpose.msra.mxu0 0.0
  %270 = vmatprep.subr.mxu0 0.0
  %271 = vmatpush1.xpose.msra.mxu0 0.0
  %272 = vmatprep.subr.mxu0 0.0
  %273 = vmatpush1.xpose.msra.mxu0 0.0
  %274 = vmatprep.subr.mxu0 0.0
  %275 = vmatpush1.xpose.msra.mxu0 0.0
  %276 = vmatprep.subr.mxu0 0.0
  %277 = vmatpush1.xpose.msra.mxu0 0.0
  %278 = vmatprep.subr.mxu0 0.0
  %279 = vmatpush1.xpose.msra.mxu0 0.0
  %280 = vmatprep.subr.mxu0 0.0
  %281 = vmatpush1.xpose.msra.mxu0 0.0
  %282 = vmatprep.subr.mxu0 0.0
  %283 = vmatpush1.xpose.msra.mxu0 0.0
  %284 = vmatprep.subr.mxu0 0.0
  %285 = vmatpush1.xpose.msra.mxu0 0.0
  %286 = vmatprep.subr.mxu0 0.0
  %287 = vmatpush1.xpose.msra.mxu0 0.0
  %288 = vmatprep.subr.mxu0 0.0
  %289 = vmatpush1.xpose.msra.mxu0 0.0
  %290 = vmatprep.mubr.f32.mxu0 0.0
  %291 = vmatmul.mubr.f32.gmra.mrb[0].mxu0 %v218
  %v292 = vpop.f32.mrb[0].mxu0
  %v293 = vadd.f32 %v113, %v292
  %v294 = vpop.f32.mrb[0].mxu0
  %295 = vmatprep.mubr.f32.mxu0 0.0
  %296 = vmatmul.mubr.f32.gmra.mrb[0].mxu0 %v220
  %v297 = vpop.f32.mrb[0].mxu0
  %v298 = vadd.f32 %v114, %v297
  %v299 = vpop.f32.mrb[0].mxu0
  %300 = vdwg.mxu0
  %v301 = vsel %vm217, %v293, -inf
  %302 = vmax.xlane.f32.xlu0 %v301
  %v303 = vpop.xlane.xlu0 %302
  %v304 = vsel %vm217, %v298, -inf
  %305 = vmax.xlane.f32.xlu0 %v304
  %v306 = vpop.xlane.xlu0 %305
  %v307 = vsub.f32 %v293, %v303
  %v308 = vsub.f32 %v298, %v306
  %v309 = vmul.f32 %v307, 1.442695
  %v310 = vpow.pop %v309
  %v311 = vmul.f32 %v308, 1.442695
  %v312 = vpow.pop %v311
  %v313 = vsel %vm217, %v310, 0.0
  %314 = vadd.xlane.f32.xlu0 %v313
  %v315 = vpop.xlane.xlu0 %314
  %v316 = vsel %vm217, %v312, 0.0
  %317 = vadd.xlane.f32.xlu0 %v316
  %v318 = vpop.xlane.xlu0 %317
  %v319 = vrcp.pop %v315
  %v320 = vmul.f32 %v310, %v319
  %v321 = vrcp.pop %v318
  %v322 = vmul.f32 %v312, %v321
  %323 = vrot.lane.b32.xlu0 %v199, 64
  %v324 = vpop.permute.xlu0 %323
  %325 = vrot.lane.b32.xlu0 %v204, 64
  %v326 = vpop.permute.xlu0 %325
  %v330 = vsel %vm217, %v320, 0
  %v333 = vsel %vm217, %v322, 0
  %335 = vmatprep.subr.mxu0 0.0
  %336 = vmatpush1.msra.mxu0 %v324
  %337 = vmatprep.subr.mxu0 0.0
  %338 = vmatpush1.msra.mxu0 %v326
  %339 = vmatprep.subr.mxu0 0.0
  %340 = vmatpush1.msra.mxu0 0.0
  %341 = vmatprep.subr.mxu0 0.0
  %342 = vmatpush1.msra.mxu0 0.0
  %343 = vmatprep.subr.mxu0 0.0
  %344 = vmatpush1.msra.mxu0 0.0
  %345 = vmatprep.subr.mxu0 0.0
  %346 = vmatpush1.msra.mxu0 0.0
  %347 = vmatprep.subr.mxu0 0.0
  %348 = vmatpush1.msra.mxu0 0.0
  %349 = vmatprep.subr.mxu0 0.0
  %350 = vmatpush1.msra.mxu0 0.0
  %351 = vmatprep.subr.mxu0 0.0
  %352 = vmatpush1.msra.mxu0 0.0
  %353 = vmatprep.subr.mxu0 0.0
  %354 = vmatpush1.msra.mxu0 0.0
  %355 = vmatprep.subr.mxu0 0.0
  %356 = vmatpush1.msra.mxu0 0.0
  %357 = vmatprep.subr.mxu0 0.0
  %358 = vmatpush1.msra.mxu0 0.0
  %359 = vmatprep.subr.mxu0 0.0
  %360 = vmatpush1.msra.mxu0 0.0
  %361 = vmatprep.subr.mxu0 0.0
  %362 = vmatpush1.msra.mxu0 0.0
  %363 = vmatprep.subr.mxu0 0.0
  %364 = vmatpush1.msra.mxu0 0.0
  %365 = vmatprep.subr.mxu0 0.0
  %366 = vmatpush1.msra.mxu0 0.0
  %367 = vmatprep.subr.mxu0 0.0
  %368 = vmatpush1.msra.mxu0 0.0
  %369 = vmatprep.subr.mxu0 0.0
  %370 = vmatpush1.msra.mxu0 0.0
  %371 = vmatprep.subr.mxu0 0.0
  %372 = vmatpush1.msra.mxu0 0.0
  %373 = vmatprep.subr.mxu0 0.0
  %374 = vmatpush1.msra.mxu0 0.0
  %375 = vmatprep.subr.mxu0 0.0
  %376 = vmatpush1.msra.mxu0 0.0
  %377 = vmatprep.subr.mxu0 0.0
  %378 = vmatpush1.msra.mxu0 0.0
  %379 = vmatprep.subr.mxu0 0.0
  %380 = vmatpush1.msra.mxu0 0.0
  %381 = vmatprep.subr.mxu0 0.0
  %382 = vmatpush1.msra.mxu0 0.0
  %383 = vmatprep.subr.mxu0 0.0
  %384 = vmatpush1.msra.mxu0 0.0
  %385 = vmatprep.subr.mxu0 0.0
  %386 = vmatpush1.msra.mxu0 0.0
  %387 = vmatprep.subr.mxu0 0.0
  %388 = vmatpush1.msra.mxu0 0.0
  %389 = vmatprep.subr.mxu0 0.0
  %390 = vmatpush1.msra.mxu0 0.0
  %391 = vmatprep.subr.mxu0 0.0
  %392 = vmatpush1.msra.mxu0 0.0
  %393 = vmatprep.subr.mxu0 0.0
  %394 = vmatpush1.msra.mxu0 0.0
  %395 = vmatprep.subr.mxu0 0.0
  %396 = vmatpush1.msra.mxu0 0.0
  %397 = vmatprep.subr.mxu0 0.0
  %398 = vmatpush1.msra.mxu0 0.0
  %399 = vmatprep.mubr.f32.mxu0 0.0
  %400 = vmatmul.mubr.f32.gmra.mrb[0].mxu0 %v330
  %v401 = vpop.f32.mrb[0].mxu0
  %v402 = vadd.f32 0.0, %v401
  %v403 = vpop.f32.mrb[0].mxu0
  %404 = vmatprep.mubr.f32.mxu0 0.0
  %405 = vmatmul.mubr.f32.gmra.mrb[0].mxu0 %v333
  %v406 = vpop.f32.mrb[0].mxu0
  %v407 = vadd.f32 0.0, %v406
  %v408 = vpop.f32.mrb[0].mxu0
  %409 = vdwg.mxu0
  %410 = vrot.lane.b32.xlu0 %v199, 112
  %v411 = vpop.permute.xlu0 %410
  %412 = vrot.lane.b32.xlu0 %v204, 112
  %v413 = vpop.permute.xlu0 %412
  %414 = vrot.lane.b32.xlu0 %v199, 80
  %v415 = vpop.permute.xlu0 %414
  %416 = vrot.lane.b32.xlu0 %v204, 80
  %v417 = vpop.permute.xlu0 %416
  %v418 = vsel %vm217, %v411, 0
  %v420 = vsel %vm217, %v413, 0
  %v422 = vsel %vm217, %v415, 0
  %v424 = vsel %vm217, %v417, 0
  %426 = vmatprep.subr.mxu0 0.0
  %427 = vmatpush1.xpose.msra.mxu0 %v422
  %428 = vmatprep.subr.mxu0 0.0
  %429 = vmatpush1.xpose.msra.mxu0 %v424
  %430 = vmatprep.subr.mxu0 0.0
  %431 = vmatpush1.xpose.msra.mxu0 0.0
  %432 = vmatprep.subr.mxu0 0.0
  %433 = vmatpush1.xpose.msra.mxu0 0.0
  %434 = vmatprep.subr.mxu0 0.0
  %435 = vmatpush1.xpose.msra.mxu0 0.0
  %436 = vmatprep.subr.mxu0 0.0
  %437 = vmatpush1.xpose.msra.mxu0 0.0
  %438 = vmatprep.subr.mxu0 0.0
  %439 = vmatpush1.xpose.msra.mxu0 0.0
  %440 = vmatprep.subr.mxu0 0.0
  %441 = vmatpush1.xpose.msra.mxu0 0.0
  %442 = vmatprep.subr.mxu0 0.0
  %443 = vmatpush1.xpose.msra.mxu0 0.0
  %444 = vmatprep.subr.mxu0 0.0
  %445 = vmatpush1.xpose.msra.mxu0 0.0
  %446 = vmatprep.subr.mxu0 0.0
  %447 = vmatpush1.xpose.msra.mxu0 0.0
  %448 = vmatprep.subr.mxu0 0.0
  %449 = vmatpush1.xpose.msra.mxu0 0.0
  %450 = vmatprep.subr.mxu0 0.0
  %451 = vmatpush1.xpose.msra.mxu0 0.0
  %452 = vmatprep.subr.mxu0 0.0
  %453 = vmatpush1.xpose.msra.mxu0 0.0
  %454 = vmatprep.subr.mxu0 0.0
  %455 = vmatpush1.xpose.msra.mxu0 0.0
  %456 = vmatprep.subr.mxu0 0.0
  %457 = vmatpush1.xpose.msra.mxu0 0.0
  %458 = vmatprep.subr.mxu0 0.0
  %459 = vmatpush1.xpose.msra.mxu0 0.0
  %460 = vmatprep.subr.mxu0 0.0
  %461 = vmatpush1.xpose.msra.mxu0 0.0
  %462 = vmatprep.subr.mxu0 0.0
  %463 = vmatpush1.xpose.msra.mxu0 0.0
  %464 = vmatprep.subr.mxu0 0.0
  %465 = vmatpush1.xpose.msra.mxu0 0.0
  %466 = vmatprep.subr.mxu0 0.0
  %467 = vmatpush1.xpose.msra.mxu0 0.0
  %468 = vmatprep.subr.mxu0 0.0
  %469 = vmatpush1.xpose.msra.mxu0 0.0
  %470 = vmatprep.subr.mxu0 0.0
  %471 = vmatpush1.xpose.msra.mxu0 0.0
  %472 = vmatprep.subr.mxu0 0.0
  %473 = vmatpush1.xpose.msra.mxu0 0.0
  %474 = vmatprep.subr.mxu0 0.0
  %475 = vmatpush1.xpose.msra.mxu0 0.0
  %476 = vmatprep.subr.mxu0 0.0
  %477 = vmatpush1.xpose.msra.mxu0 0.0
  %478 = vmatprep.subr.mxu0 0.0
  %479 = vmatpush1.xpose.msra.mxu0 0.0
  %480 = vmatprep.subr.mxu0 0.0
  %481 = vmatpush1.xpose.msra.mxu0 0.0
  %482 = vmatprep.subr.mxu0 0.0
  %483 = vmatpush1.xpose.msra.mxu0 0.0
  %484 = vmatprep.subr.mxu0 0.0
  %485 = vmatpush1.xpose.msra.mxu0 0.0
  %486 = vmatprep.subr.mxu0 0.0
  %487 = vmatpush1.xpose.msra.mxu0 0.0
  %488 = vmatprep.subr.mxu0 0.0
  %489 = vmatpush1.xpose.msra.mxu0 0.0
  %490 = vmatprep.mubr.f32.mxu0 0.0
  %491 = vmatmul.mubr.f32.gmra.mrb[0].mxu0 %v418
  %v492 = vpop.f32.mrb[0].mxu0
  %v493 = vadd.f32 %v113, %v492
  %v494 = vpop.f32.mrb[0].mxu0
  %495 = vmatprep.mubr.f32.mxu0 0.0
  %496 = vmatmul.mubr.f32.gmra.mrb[0].mxu0 %v420
  %v497 = vpop.f32.mrb[0].mxu0
  %v498 = vadd.f32 %v114, %v497
  %v499 = vpop.f32.mrb[0].mxu0
  %500 = vdwg.mxu0
  %v501 = vsel %vm217, %v493, -inf
  %502 = vmax.xlane.f32.xlu0 %v501
  %v503 = vpop.xlane.xlu0 %502
  %v504 = vsel %vm217, %v498, -inf
  %505 = vmax.xlane.f32.xlu0 %v504
  %v506 = vpop.xlane.xlu0 %505
  %v507 = vsub.f32 %v493, %v503
  %v508 = vsub.f32 %v498, %v506
  %v509 = vmul.f32 %v507, 1.442695
  %v510 = vpow.pop %v509
  %v511 = vmul.f32 %v508, 1.442695
  %v512 = vpow.pop %v511
  %v513 = vsel %vm217, %v510, 0.0
  %514 = vadd.xlane.f32.xlu0 %v513
  %v515 = vpop.xlane.xlu0 %514
  %v516 = vsel %vm217, %v512, 0.0
  %517 = vadd.xlane.f32.xlu0 %v516
  %v518 = vpop.xlane.xlu0 %517
  %v519 = vrcp.pop %v515
  %v520 = vmul.f32 %v510, %v519
  %v521 = vrcp.pop %v518
  %v522 = vmul.f32 %v512, %v521
  %523 = vrot.lane.b32.xlu0 %v199, 48
  %v524 = vpop.permute.xlu0 %523
  %525 = vrot.lane.b32.xlu0 %v204, 48
  %v526 = vpop.permute.xlu0 %525
  %v530 = vsel %vm217, %v520, 0
  %v533 = vsel %vm217, %v522, 0
  %535 = vmatprep.subr.mxu0 0.0
  %536 = vmatpush1.msra.mxu0 %v524
  %537 = vmatprep.subr.mxu0 0.0
  %538 = vmatpush1.msra.mxu0 %v526
  %539 = vmatprep.subr.mxu0 0.0
  %540 = vmatpush1.msra.mxu0 0.0
  %541 = vmatprep.subr.mxu0 0.0
  %542 = vmatpush1.msra.mxu0 0.0
  %543 = vmatprep.subr.mxu0 0.0
  %544 = vmatpush1.msra.mxu0 0.0
  %545 = vmatprep.subr.mxu0 0.0
  %546 = vmatpush1.msra.mxu0 0.0
  %547 = vmatprep.subr.mxu0 0.0
  %548 = vmatpush1.msra.mxu0 0.0
  %549 = vmatprep.subr.mxu0 0.0
  %550 = vmatpush1.msra.mxu0 0.0
  %551 = vmatprep.subr.mxu0 0.0
  %552 = vmatpush1.msra.mxu0 0.0
  %553 = vmatprep.subr.mxu0 0.0
  %554 = vmatpush1.msra.mxu0 0.0
  %555 = vmatprep.subr.mxu0 0.0
  %556 = vmatpush1.msra.mxu0 0.0
  %557 = vmatprep.subr.mxu0 0.0
  %558 = vmatpush1.msra.mxu0 0.0
  %559 = vmatprep.subr.mxu0 0.0
  %560 = vmatpush1.msra.mxu0 0.0
  %561 = vmatprep.subr.mxu0 0.0
  %562 = vmatpush1.msra.mxu0 0.0
  %563 = vmatprep.subr.mxu0 0.0
  %564 = vmatpush1.msra.mxu0 0.0
  %565 = vmatprep.subr.mxu0 0.0
  %566 = vmatpush1.msra.mxu0 0.0
  %567 = vmatprep.subr.mxu0 0.0
  %568 = vmatpush1.msra.mxu0 0.0
  %569 = vmatprep.subr.mxu0 0.0
  %570 = vmatpush1.msra.mxu0 0.0
  %571 = vmatprep.subr.mxu0 0.0
  %572 = vmatpush1.msra.mxu0 0.0
  %573 = vmatprep.subr.mxu0 0.0
  %574 = vmatpush1.msra.mxu0 0.0
  %575 = vmatprep.subr.mxu0 0.0
  %576 = vmatpush1.msra.mxu0 0.0
  %577 = vmatprep.subr.mxu0 0.0
  %578 = vmatpush1.msra.mxu0 0.0
  %579 = vmatprep.subr.mxu0 0.0
  %580 = vmatpush1.msra.mxu0 0.0
  %581 = vmatprep.subr.mxu0 0.0
  %582 = vmatpush1.msra.mxu0 0.0
  %583 = vmatprep.subr.mxu0 0.0
  %584 = vmatpush1.msra.mxu0 0.0
  %585 = vmatprep.subr.mxu0 0.0
  %586 = vmatpush1.msra.mxu0 0.0
  %587 = vmatprep.subr.mxu0 0.0
  %588 = vmatpush1.msra.mxu0 0.0
  %589 = vmatprep.subr.mxu0 0.0
  %590 = vmatpush1.msra.mxu0 0.0
  %591 = vmatprep.subr.mxu0 0.0
  %592 = vmatpush1.msra.mxu0 0.0
  %593 = vmatprep.subr.mxu0 0.0
  %594 = vmatpush1.msra.mxu0 0.0
  %595 = vmatprep.subr.mxu0 0.0
  %596 = vmatpush1.msra.mxu0 0.0
  %597 = vmatprep.subr.mxu0 0.0
  %598 = vmatpush1.msra.mxu0 0.0
  %599 = vmatprep.mubr.f32.mxu0 0.0
  %600 = vmatmul.mubr.f32.gmra.mrb[0].mxu0 %v530
  %v601 = vpop.f32.mrb[0].mxu0
  %v602 = vadd.f32 0.0, %v601
  %v603 = vpop.f32.mrb[0].mxu0
  %604 = vmatprep.mubr.f32.mxu0 0.0
  %605 = vmatmul.mubr.f32.gmra.mrb[0].mxu0 %v533
  %v606 = vpop.f32.mrb[0].mxu0
  %v607 = vadd.f32 0.0, %v606
  %v608 = vpop.f32.mrb[0].mxu0
  %609 = vdwg.mxu0
  %v611 = vsel %vm217, %v602, 0
  %v614 = vsel %vm217, %v607, 0
  %616 = vmatprep.subr.mxu0 0.0
  %617 = vmatpush1.msra.mxu0 %v209
  %618 = vmatprep.subr.mxu0 0.0
  %619 = vmatpush1.msra.mxu0 %v210
  %620 = vmatprep.subr.mxu0 0.0
  %621 = vmatpush1.msra.mxu0 0.0
  %622 = vmatprep.subr.mxu0 0.0
  %623 = vmatpush1.msra.mxu0 0.0
  %624 = vmatprep.subr.mxu0 0.0
  %625 = vmatpush1.msra.mxu0 0.0
  %626 = vmatprep.subr.mxu0 0.0
  %627 = vmatpush1.msra.mxu0 0.0
  %628 = vmatprep.subr.mxu0 0.0
  %629 = vmatpush1.msra.mxu0 0.0
  %630 = vmatprep.subr.mxu0 0.0
  %631 = vmatpush1.msra.mxu0 0.0
  %632 = vmatprep.subr.mxu0 0.0
  %633 = vmatpush1.msra.mxu0 0.0
  %634 = vmatprep.subr.mxu0 0.0
  %635 = vmatpush1.msra.mxu0 0.0
  %636 = vmatprep.subr.mxu0 0.0
  %637 = vmatpush1.msra.mxu0 0.0
  %638 = vmatprep.subr.mxu0 0.0
  %639 = vmatpush1.msra.mxu0 0.0
  %640 = vmatprep.subr.mxu0 0.0
  %641 = vmatpush1.msra.mxu0 0.0
  %642 = vmatprep.subr.mxu0 0.0
  %643 = vmatpush1.msra.mxu0 0.0
  %644 = vmatprep.subr.mxu0 0.0
  %645 = vmatpush1.msra.mxu0 0.0
  %646 = vmatprep.subr.mxu0 0.0
  %647 = vmatpush1.msra.mxu0 0.0
  %648 = vmatprep.subr.mxu0 0.0
  %649 = vmatpush1.msra.mxu0 0.0
  %650 = vmatprep.subr.mxu0 0.0
  %651 = vmatpush1.msra.mxu0 0.0
  %652 = vmatprep.subr.mxu0 0.0
  %653 = vmatpush1.msra.mxu0 0.0
  %654 = vmatprep.subr.mxu0 0.0
  %655 = vmatpush1.msra.mxu0 0.0
  %656 = vmatprep.subr.mxu0 0.0
  %657 = vmatpush1.msra.mxu0 0.0
  %658 = vmatprep.subr.mxu0 0.0
  %659 = vmatpush1.msra.mxu0 0.0
  %660 = vmatprep.subr.mxu0 0.0
  %661 = vmatpush1.msra.mxu0 0.0
  %662 = vmatprep.subr.mxu0 0.0
  %663 = vmatpush1.msra.mxu0 0.0
  %664 = vmatprep.subr.mxu0 0.0
  %665 = vmatpush1.msra.mxu0 0.0
  %666 = vmatprep.subr.mxu0 0.0
  %667 = vmatpush1.msra.mxu0 0.0
  %668 = vmatprep.subr.mxu0 0.0
  %669 = vmatpush1.msra.mxu0 0.0
  %670 = vmatprep.subr.mxu0 0.0
  %671 = vmatpush1.msra.mxu0 0.0
  %672 = vmatprep.subr.mxu0 0.0
  %673 = vmatpush1.msra.mxu0 0.0
  %674 = vmatprep.subr.mxu0 0.0
  %675 = vmatpush1.msra.mxu0 0.0
  %676 = vmatprep.subr.mxu0 0.0
  %677 = vmatpush1.msra.mxu0 0.0
  %678 = vmatprep.subr.mxu0 0.0
  %679 = vmatpush1.msra.mxu0 0.0
  %680 = vmatprep.mubr.f32.mxu0 0.0
  %681 = vmatmul.mubr.f32.gmra.mrb[0].mxu0 %v611
  %v682 = vpop.f32.mrb[0].mxu0
  %v683 = vadd.f32 0.0, %v682
  %v684 = vpop.f32.mrb[0].mxu0
  %685 = vmatprep.mubr.f32.mxu0 0.0
  %686 = vmatmul.mubr.f32.gmra.mrb[0].mxu0 %v614
  %v687 = vpop.f32.mrb[0].mxu0
  %v688 = vadd.f32 0.0, %v687
  %v689 = vpop.f32.mrb[0].mxu0
  %690 = vdwg.mxu0
  %v692 = vsel %vm217, %v402, 0
  %v695 = vsel %vm217, %v407, 0
  %697 = vmatprep.subr.mxu0 0.0
  %698 = vmatpush1.msra.mxu0 %v207
  %699 = vmatprep.subr.mxu0 0.0
  %700 = vmatpush1.msra.mxu0 %v208
  %701 = vmatprep.subr.mxu0 0.0
  %702 = vmatpush1.msra.mxu0 0.0
  %703 = vmatprep.subr.mxu0 0.0
  %704 = vmatpush1.msra.mxu0 0.0
  %705 = vmatprep.subr.mxu0 0.0
  %706 = vmatpush1.msra.mxu0 0.0
  %707 = vmatprep.subr.mxu0 0.0
  %708 = vmatpush1.msra.mxu0 0.0
  %709 = vmatprep.subr.mxu0 0.0
  %710 = vmatpush1.msra.mxu0 0.0
  %711 = vmatprep.subr.mxu0 0.0
  %712 = vmatpush1.msra.mxu0 0.0
  %713 = vmatprep.subr.mxu0 0.0
  %714 = vmatpush1.msra.mxu0 0.0
  %715 = vmatprep.subr.mxu0 0.0
  %716 = vmatpush1.msra.mxu0 0.0
  %717 = vmatprep.subr.mxu0 0.0
  %718 = vmatpush1.msra.mxu0 0.0
  %719 = vmatprep.subr.mxu0 0.0
  %720 = vmatpush1.msra.mxu0 0.0
  %721 = vmatprep.subr.mxu0 0.0
  %722 = vmatpush1.msra.mxu0 0.0
  %723 = vmatprep.subr.mxu0 0.0
  %724 = vmatpush1.msra.mxu0 0.0
  %725 = vmatprep.subr.mxu0 0.0
  %726 = vmatpush1.msra.mxu0 0.0
  %727 = vmatprep.subr.mxu0 0.0
  %728 = vmatpush1.msra.mxu0 0.0
  %729 = vmatprep.subr.mxu0 0.0
  %730 = vmatpush1.msra.mxu0 0.0
  %731 = vmatprep.subr.mxu0 0.0
  %732 = vmatpush1.msra.mxu0 0.0
  %733 = vmatprep.subr.mxu0 0.0
  %734 = vmatpush1.msra.mxu0 0.0
  %735 = vmatprep.subr.mxu0 0.0
  %736 = vmatpush1.msra.mxu0 0.0
  %737 = vmatprep.subr.mxu0 0.0
  %738 = vmatpush1.msra.mxu0 0.0
  %739 = vmatprep.subr.mxu0 0.0
  %740 = vmatpush1.msra.mxu0 0.0
  %741 = vmatprep.subr.mxu0 0.0
  %742 = vmatpush1.msra.mxu0 0.0
  %743 = vmatprep.subr.mxu0 0.0
  %744 = vmatpush1.msra.mxu0 0.0
  %745 = vmatprep.subr.mxu0 0.0
  %746 = vmatpush1.msra.mxu0 0.0
  %747 = vmatprep.subr.mxu0 0.0
  %748 = vmatpush1.msra.mxu0 0.0
  %749 = vmatprep.subr.mxu0 0.0
  %750 = vmatpush1.msra.mxu0 0.0
  %751 = vmatprep.subr.mxu0 0.0
  %752 = vmatpush1.msra.mxu0 0.0
  %753 = vmatprep.subr.mxu0 0.0
  %754 = vmatpush1.msra.mxu0 0.0
  %755 = vmatprep.subr.mxu0 0.0
  %756 = vmatpush1.msra.mxu0 0.0
  %757 = vmatprep.subr.mxu0 0.0
  %758 = vmatpush1.msra.mxu0 0.0
  %759 = vmatprep.subr.mxu0 0.0
  %760 = vmatpush1.msra.mxu0 0.0
  %761 = vmatprep.mubr.f32.mxu0 0.0
  %762 = vmatmul.mubr.f32.gmra.mrb[0].mxu0 %v692
  %v763 = vpop.f32.mrb[0].mxu0
  %v764 = vadd.f32 %v683, %v763
  %v765 = vpop.f32.mrb[0].mxu0
  %766 = vmatprep.mubr.f32.mxu0 0.0
  %767 = vmatmul.mubr.f32.gmra.mrb[0].mxu0 %v695
  %v768 = vpop.f32.mrb[0].mxu0
  %v769 = vadd.f32 %v688, %v768
  %v770 = vpop.f32.mrb[0].mxu0
  %771 = vdwg.mxu0
  %v772 = vld [vmem:[%s7] sm:$0x1]
  %v774 = vlaneseq
  %v775 = vshrl.u32 %v774, 7
  %v776 = vsub.s32 0, %v775
  %v777 = vrot.slane %v772, %v776
  %v779 = vadd.f32 %v764, %v777
  %v780 = vadd.f32 %v769, %v777
  %v781 = vadd.f32 %v779, %v111
  %v782 = vadd.f32 %v780, %v112
  %v783 = vld [vmem:[%s8] sm:$0x1]
  %v784 = vld [vmem:[%s9] sm:$0x1]
  %v785 = vsel %vm69, %v781, 0.0
  %786 = vadd.xlane.f32.xlu0 %v785
  %v787 = vpop.xlane.xlu0 %786
  %v788 = vsel %vm69, %v782, 0.0
  %789 = vadd.xlane.f32.xlu0 %v788
  %v790 = vpop.xlane.xlu0 %789
  %v791 = vmul.f32 %v787, %v76
  %v792 = vmul.f32 %v790, %v76
  %v793 = vsub.f32 %v781, %v791
  %v794 = vsub.f32 %v782, %v792
  %v795 = vmul.f32 %v793, %v793
  %v796 = vmul.f32 %v794, %v794
  %v797 = vsel %vm69, %v795, 0.0
  %798 = vadd.xlane.f32.xlu0 %v797
  %v799 = vpop.xlane.xlu0 %798
  %v800 = vsel %vm69, %v796, 0.0
  %801 = vadd.xlane.f32.xlu0 %v800
  %v802 = vpop.xlane.xlu0 %801
  %v803 = vmul.f32 %v799, %v76
  %v804 = vmul.f32 %v802, %v76
  %v805 = vadd.f32 %v803, 1e-12
  %v806 = vadd.f32 %v804, 1e-12
  %v807 = vrsqrt.pop %v805
  %v808 = vrsqrt.pop %v806
  %v809 = vmul.f32 %v793, %v807
  %v810 = vmul.f32 %v794, %v808
  %v812 = vlaneseq
  %v813 = vshrl.u32 %v812, 7
  %v814 = vsub.s32 0, %v813
  %v815 = vrot.slane %v783, %v814
  %v817 = vmul.f32 %v809, %v815
  %v818 = vmul.f32 %v810, %v815
  %v820 = vlaneseq
  %v821 = vshrl.u32 %v820, 7
  %v822 = vsub.s32 0, %v821
  %v823 = vrot.slane %v784, %v822
  %v825 = vadd.f32 %v817, %v823
  %v826 = vadd.f32 %v818, %v823
  %v827 = vld [vmem:[%s10] sm:$0xff]
  %v828 = vld [vmem:[%s10 + $0x8] sm:$0xff]
  %v829 = vld [vmem:[%s10 + $0x10] sm:$0xff]
  %v830 = vld [vmem:[%s10 + $0x18] sm:$0xff]
  %v831 = vld [vmem:[%s11] sm:$0x1]
  %v833 = vlaneseq
  %v834 = vshrl.u32 %v833, 7
  %v835 = vsub.s32 0, %v834
  %v836 = vrot.slane %v831, %v835
  %v839 = vsel %vm69, %v825, 0
  %v842 = vsel %vm69, %v826, 0
  %844 = vmatprep.subr.mxu0 0.0
  %845 = vmatpush1.msra.mxu0 %v827
  %846 = vmatprep.subr.mxu0 0.0
  %847 = vmatpush1.msra.mxu0 %v828
  %848 = vmatprep.subr.mxu0 0.0
  %849 = vmatpush1.msra.mxu0 %v829
  %850 = vmatprep.subr.mxu0 0.0
  %851 = vmatpush1.msra.mxu0 %v830
  %852 = vmatprep.subr.mxu0 0.0
  %853 = vmatpush1.msra.mxu0 0.0
  %854 = vmatprep.subr.mxu0 0.0
  %855 = vmatpush1.msra.mxu0 0.0
  %856 = vmatprep.subr.mxu0 0.0
  %857 = vmatpush1.msra.mxu0 0.0
  %858 = vmatprep.subr.mxu0 0.0
  %859 = vmatpush1.msra.mxu0 0.0
  %860 = vmatprep.subr.mxu0 0.0
  %861 = vmatpush1.msra.mxu0 0.0
  %862 = vmatprep.subr.mxu0 0.0
  %863 = vmatpush1.msra.mxu0 0.0
  %864 = vmatprep.subr.mxu0 0.0
  %865 = vmatpush1.msra.mxu0 0.0
  %866 = vmatprep.subr.mxu0 0.0
  %867 = vmatpush1.msra.mxu0 0.0
  %868 = vmatprep.subr.mxu0 0.0
  %869 = vmatpush1.msra.mxu0 0.0
  %870 = vmatprep.subr.mxu0 0.0
  %871 = vmatpush1.msra.mxu0 0.0
  %872 = vmatprep.subr.mxu0 0.0
  %873 = vmatpush1.msra.mxu0 0.0
  %874 = vmatprep.subr.mxu0 0.0
  %875 = vmatpush1.msra.mxu0 0.0
  %876 = vmatprep.subr.mxu0 0.0
  %877 = vmatpush1.msra.mxu0 0.0
  %878 = vmatprep.subr.mxu0 0.0
  %879 = vmatpush1.msra.mxu0 0.0
  %880 = vmatprep.subr.mxu0 0.0
  %881 = vmatpush1.msra.mxu0 0.0
  %882 = vmatprep.subr.mxu0 0.0
  %883 = vmatpush1.msra.mxu0 0.0
  %884 = vmatprep.subr.mxu0 0.0
  %885 = vmatpush1.msra.mxu0 0.0
  %886 = vmatprep.subr.mxu0 0.0
  %887 = vmatpush1.msra.mxu0 0.0
  %888 = vmatprep.subr.mxu0 0.0
  %889 = vmatpush1.msra.mxu0 0.0
  %890 = vmatprep.subr.mxu0 0.0
  %891 = vmatpush1.msra.mxu0 0.0
  %892 = vmatprep.subr.mxu0 0.0
  %893 = vmatpush1.msra.mxu0 0.0
  %894 = vmatprep.subr.mxu0 0.0
  %895 = vmatpush1.msra.mxu0 0.0
  %896 = vmatprep.subr.mxu0 0.0
  %897 = vmatpush1.msra.mxu0 0.0
  %898 = vmatprep.subr.mxu0 0.0
  %899 = vmatpush1.msra.mxu0 0.0
  %900 = vmatprep.subr.mxu0 0.0
  %901 = vmatpush1.msra.mxu0 0.0
  %902 = vmatprep.subr.mxu0 0.0
  %903 = vmatpush1.msra.mxu0 0.0
  %904 = vmatprep.subr.mxu0 0.0
  %905 = vmatpush1.msra.mxu0 0.0
  %906 = vmatprep.subr.mxu0 0.0
  %907 = vmatpush1.msra.mxu0 0.0
  %908 = vmatprep.mubr.f32.mxu0 0.0
  %909 = vmatmul.mubr.f32.gmra.mrb[0].mxu0 %v839
  %v910 = vpop.f32.mrb[0].mxu0
  %v911 = vadd.f32 %v836, %v910
  %v912 = vpop.f32.mrb[0].mxu0
  %913 = vmatprep.mubr.f32.mxu0 0.0
  %914 = vmatmul.mubr.f32.gmra.mrb[0].mxu0 %v842
  %v915 = vpop.f32.mrb[0].mxu0
  %v916 = vadd.f32 %v836, %v915
  %v917 = vpop.f32.mrb[0].mxu0
  %918 = vdwg.mxu0
  %v919 = vmul.f32 %v911, 0.5
  %v920 = vmul.f32 %v916, 0.5
  %v921 = vmul.f32 %v911, 0.044715
  %v922 = vmul.f32 %v916, 0.044715
  %v923 = vmul.f32 %v921, %v911
  %v924 = vmul.f32 %v922, %v916
  %v925 = vmul.f32 %v923, %v911
  %v926 = vmul.f32 %v924, %v916
  %v927 = vadd.f32 %v911, %v925
  %v928 = vadd.f32 %v916, %v926
  %v929 = vmul.f32 %v927, 0.7978846
  %v930 = vmul.f32 %v928, 0.7978846
  %v931 = vtanh.pop %v929
  %v932 = vtanh.pop %v930
  %v933 = vadd.f32 %v931, 1.0
  %v934 = vadd.f32 %v932, 1.0
  %v935 = vmul.f32 %v919, %v933
  %v936 = vmul.f32 %v920, %v934
  %v937 = vld [vmem:[%s12] sm:$0xff]
  %v938 = vld [vmem:[%s12 + $0x8] sm:$0xff]
  %v939 = vld [vmem:[%s12 + $0x10] sm:$0xff]
  %v940 = vld [vmem:[%s12 + $0x18] sm:$0xff]
  %v941 = vld [vmem:[%s12 + $0x20] sm:$0xff]
  %v942 = vld [vmem:[%s12 + $0x28] sm:$0xff]
  %v943 = vld [vmem:[%s12 + $0x30] sm:$0xff]
  %v944 = vld [vmem:[%s12 + $0x38] sm:$0xff]
  %v945 = vld [vmem:[%s13] sm:$0x1]
  %v947 = vlaneseq
  %v948 = vshrl.u32 %v947, 7
  %v949 = vsub.s32 0, %v948
  %v950 = vrot.slane %v945, %v949
  %vm952 = vcmask 523264
  %v954 = vsel %vm952, %v935, 0
  %v957 = vsel %vm952, %v936, 0
  %959 = vmatprep.subr.mxu0 0.0
  %960 = vmatpush1.msra.mxu0 %v937
  %961 = vmatprep.subr.mxu0 0.0
  %962 = vmatpush1.msra.mxu0 %v938
  %963 = vmatprep.subr.mxu0 0.0
  %964 = vmatpush1.msra.mxu0 %v939
  %965 = vmatprep.subr.mxu0 0.0
  %966 = vmatpush1.msra.mxu0 %v940
  %967 = vmatprep.subr.mxu0 0.0
  %968 = vmatpush1.msra.mxu0 %v941
  %969 = vmatprep.subr.mxu0 0.0
  %970 = vmatpush1.msra.mxu0 %v942
  %971 = vmatprep.subr.mxu0 0.0
  %972 = vmatpush1.msra.mxu0 %v943
  %973 = vmatprep.subr.mxu0 0.0
  %974 = vmatpush1.msra.mxu0 %v944
  %975 = vmatprep.subr.mxu0 0.0
  %976 = vmatpush1.msra.mxu0 0.0
  %977 = vmatprep.subr.mxu0 0.0
  %978 = vmatpush1.msra.mxu0 0.0
  %979 = vmatprep.subr.mxu0 0.0
  %980 = vmatpush1.msra.mxu0 0.0
  %981 = vmatprep.subr.mxu0 0.0
  %982 = vmatpush1.msra.mxu0 0.0
  %983 = vmatprep.subr.mxu0 0.0
  %984 = vmatpush1.msra.mxu0 0.0
  %985 = vmatprep.subr.mxu0 0.0
  %986 = vmatpush1.msra.mxu0 0.0
  %987 = vmatprep.subr.mxu0 0.0
  %988 = vmatpush1.msra.mxu0 0.0
  %989 = vmatprep.subr.mxu0 0.0
  %990 = vmatpush1.msra.mxu0 0.0
  %991 = vmatprep.subr.mxu0 0.0
  %992 = vmatpush1.msra.mxu0 0.0
  %993 = vmatprep.subr.mxu0 0.0
  %994 = vmatpush1.msra.mxu0 0.0
  %995 = vmatprep.subr.mxu0 0.0
  %996 = vmatpush1.msra.mxu0 0.0
  %997 = vmatprep.subr.mxu0 0.0
  %998 = vmatpush1.msra.mxu0 0.0
  %999 = vmatprep.subr.mxu0 0.0
  %1000 = vmatpush1.msra.mxu0 0.0
  %1001 = vmatprep.subr.mxu0 0.0
  %1002 = vmatpush1.msra.mxu0 0.0
  %1003 = vmatprep.subr.mxu0 0.0
  %1004 = vmatpush1.msra.mxu0 0.0
  %1005 = vmatprep.subr.mxu0 0.0
  %1006 = vmatpush1.msra.mxu0 0.0
  %1007 = vmatprep.subr.mxu0 0.0
  %1008 = vmatpush1.msra.mxu0 0.0
  %1009 = vmatprep.subr.mxu0 0.0
  %1010 = vmatpush1.msra.mxu0 0.0
  %1011 = vmatprep.subr.mxu0 0.0
  %1012 = vmatpush1.msra.mxu0 0.0
  %1013 = vmatprep.subr.mxu0 0.0
  %1014 = vmatpush1.msra.mxu0 0.0
  %1015 = vmatprep.subr.mxu0 0.0
  %1016 = vmatpush1.msra.mxu0 0.0
  %1017 = vmatprep.subr.mxu0 0.0
  %1018 = vmatpush1.msra.mxu0 0.0
  %1019 = vmatprep.subr.mxu0 0.0
  %1020 = vmatpush1.msra.mxu0 0.0
  %1021 = vmatprep.subr.mxu0 0.0
  %1022 = vmatpush1.msra.mxu0 0.0
  %1023 = vmatprep.mubr.f32.mxu0 0.0
  %1024 = vmatmul.mubr.f32.gmra.mrb[0].mxu0 %v954
  %v1025 = vpop.f32.mrb[0].mxu0
  %v1026 = vadd.f32 %v950, %v1025
  %v1027 = vpop.f32.mrb[0].mxu0
  %1028 = vmatprep.mubr.f32.mxu0 0.0
  %1029 = vmatmul.mubr.f32.gmra.mrb[0].mxu0 %v957
  %v1030 = vpop.f32.mrb[0].mxu0
  %v1031 = vadd.f32 %v950, %v1030
  %v1032 = vpop.f32.mrb[0].mxu0
  %1033 = vdwg.mxu0
  %v1034 = vadd.f32 %v1026, %v825
  %v1035 = vadd.f32 %v1031, %v826
  %v1036 = vld [vmem:[%s14] sm:$0x1]
  %v1037 = vld [vmem:[%s15] sm:$0x1]
  %v1038 = vsel %vm69, %v1034, 0.0
  %1039 = vadd.xlane.f32.xlu0 %v1038
  %v1040 = vpop.xlane.xlu0 %1039
  %v1041 = vsel %vm69, %v1035, 0.0
  %1042 = vadd.xlane.f32.xlu0 %v1041
  %v1043 = vpop.xlane.xlu0 %1042
  %v1044 = vmul.f32 %v1040, %v76
  %v1045 = vmul.f32 %v1043, %v76
  %v1046 = vsub.f32 %v1034, %v1044
  %v1047 = vsub.f32 %v1035, %v1045
  %v1048 = vmul.f32 %v1046, %v1046
  %v1049 = vmul.f32 %v1047, %v1047
  %v1050 = vsel %vm69, %v1048, 0.0
  %1051 = vadd.xlane.f32.xlu0 %v1050
  %v1052 = vpop.xlane.xlu0 %1051
  %v1053 = vsel %vm69, %v1049, 0.0
  %1054 = vadd.xlane.f32.xlu0 %v1053
  %v1055 = vpop.xlane.xlu0 %1054
  %v1056 = vmul.f32 %v1052, %v76
  %v1057 = vmul.f32 %v1055, %v76
  %v1058 = vadd.f32 %v1056, 1e-12
  %v1059 = vadd.f32 %v1057, 1e-12
  %v1060 = vrsqrt.pop %v1058
  %v1061 = vrsqrt.pop %v1059
  %v1062 = vmul.f32 %v1046, %v1060
  %v1063 = vmul.f32 %v1047, %v1061
  %v1065 = vlaneseq
  %v1066 = vshrl.u32 %v1065, 7
  %v1067 = vsub.s32 0, %v1066
  %v1068 = vrot.slane %v1036, %v1067
  %v1070 = vmul.f32 %v1062, %v1068
  %v1071 = vmul.f32 %v1063, %v1068
  %v1073 = vlaneseq
  %v1074 = vshrl.u32 %v1073, 7
  %v1075 = vsub.s32 0, %v1074
  %v1076 = vrot.slane %v1037, %v1075
  %v1078 = vadd.f32 %v1070, %v1076
  %v1079 = vadd.f32 %v1071, %v1076
  %s1080 = scalar_lea.vmem %s4, 32
  %v1081 = vld [vmem:[%s1080] sm:$0xff]
  %v1082 = vld [vmem:[%s1080 + $0x8] sm:$0xff]
  %v1083 = vld [vmem:[%s1080 + $0x10] sm:$0xff]
  %v1084 = vld [vmem:[%s1080 + $0x18] sm:$0xff]
  %s1085 = scalar_lea.vmem %s5, 1
  %v1086 = vld [vmem:[%s1085] sm:$0x1]
  %v1088 = vlaneseq
  %v1089 = vshrl.u32 %v1088, 7
  %v1090 = vsub.s32 0, %v1089
  %v1091 = vrot.slane %v1086, %v1090
  %v1094 = vsel %vm69, %v1078, 0
  %v1097 = vsel %vm69, %v1079, 0
  %1099 = vmatprep.subr.mxu0 0.0
  %1100 = vmatpush1.msra.mxu0 %v1081
  %1101 = vmatprep.subr.mxu0 0.0
  %1102 = vmatpush1.msra.mxu0 %v1082
  %1103 = vmatprep.subr.mxu0 0.0
  %1104 = vmatpush1.msra.mxu0 %v1083
  %1105 = vmatprep.subr.mxu0 0.0
  %1106 = vmatpush1.msra.mxu0 %v1084
  %1107 = vmatprep.subr.mxu0 0.0
  %1108 = vmatpush1.msra.mxu0 0.0
  %1109 = vmatprep.subr.mxu0 0.0
  %1110 = vmatpush1.msra.mxu0 0.0
  %1111 = vmatprep.subr.mxu0 0.0
  %1112 = vmatpush1.msra.mxu0 0.0
  %1113 = vmatprep.subr.mxu0 0.0
  %1114 = vmatpush1.msra.mxu0 0.0
  %1115 = vmatprep.subr.mxu0 0.0
  %1116 = vmatpush1.msra.mxu0 0.0
  %1117 = vmatprep.subr.mxu0 0.0
  %1118 = vmatpush1.msra.mxu0 0.0
  %1119 = vmatprep.subr.mxu0 0.0
  %1120 = vmatpush1.msra.mxu0 0.0
  %1121 = vmatprep.subr.mxu0 0.0
  %1122 = vmatpush1.msra.mxu0 0.0
  %1123 = vmatprep.subr.mxu0 0.0
  %1124 = vmatpush1.msra.mxu0 0.0
  %1125 = vmatprep.subr.mxu0 0.0
  %1126 = vmatpush1.msra.mxu0 0.0
  %1127 = vmatprep.subr.mxu0 0.0
  %1128 = vmatpush1.msra.mxu0 0.0
  %1129 = vmatprep.subr.mxu0 0.0
  %1130 = vmatpush1.msra.mxu0 0.0
  %1131 = vmatprep.subr.mxu0 0.0
  %1132 = vmatpush1.msra.mxu0 0.0
  %1133 = vmatprep.subr.mxu0 0.0
  %1134 = vmatpush1.msra.mxu0 0.0
  %1135 = vmatprep.subr.mxu0 0.0
  %1136 = vmatpush1.msra.mxu0 0.0
  %1137 = vmatprep.subr.mxu0 0.0
  %1138 = vmatpush1.msra.mxu0 0.0
  %1139 = vmatprep.subr.mxu0 0.0
  %1140 = vmatpush1.msra.mxu0 0.0
  %1141 = vmatprep.subr.mxu0 0.0
  %1142 = vmatpush1.msra.mxu0 0.0
  %1143 = vmatprep.subr.mxu0 0.0
  %1144 = vmatpush1.msra.mxu0 0.0
  %1145 = vmatprep.subr.mxu0 0.0
  %1146 = vmatpush1.msra.mxu0 0.0
  %1147 = vmatprep.subr.mxu0 0.0
  %1148 = vmatpush1.msra.mxu0 0.0
  %1149 = vmatprep.subr.mxu0 0.0
  %1150 = vmatpush1.msra.mxu0 0.0
  %1151 = vmatprep.subr.mxu0 0.0
  %1152 = vmatpush1.msra.mxu0 0.0
  %1153 = vmatprep.subr.mxu0 0.0
  %1154 = vmatpush1.msra.mxu0 0.0
  %1155 = vmatprep.subr.mxu0 0.0
  %1156 = vmatpush1.msra.mxu0 0.0
  %1157 = vmatprep.subr.mxu0 0.0
  %1158 = vmatpush1.msra.mxu0 0.0
  %1159 = vmatprep.subr.mxu0 0.0
  %1160 = vmatpush1.msra.mxu0 0.0
  %1161 = vmatprep.subr.mxu0 0.0
  %1162 = vmatpush1.msra.mxu0 0.0
  %1163 = vmatprep.mubr.f32.mxu0 0.0
  %1164 = vmatmul.mubr.f32.gmra.mrb[0].mxu0 %v1094
  %v1165 = vpop.f32.mrb[0].mxu0
  %v1166 = vadd.f32 %v1091, %v1165
  %v1167 = vpop.f32.mrb[0].mxu0
  %1168 = vmatprep.mubr.f32.mxu0 0.0
  %1169 = vmatmul.mubr.f32.gmra.mrb[0].mxu0 %v1097
  %v1170 = vpop.f32.mrb[0].mxu0
  %v1171 = vadd.f32 %v1091, %v1170
  %v1172 = vpop.f32.mrb[0].mxu0
  %1173 = vdwg.mxu0
  %s1174 = scalar_lea.vmem %s6, 32
  %v1175 = vld [vmem:[%s1174] sm:$0xff]
  %v1176 = vld [vmem:[%s1174 + $0x8] sm:$0xff]
  %v1177 = vld [vmem:[%s1174 + $0x10] sm:$0xff]
  %v1178 = vld [vmem:[%s1174 + $0x18] sm:$0xff]
  %1181 = vrot.lane.b32.xlu0 %v1166, 96
  %v1182 = vpop.permute.xlu0 %1181
  %1183 = vrot.lane.b32.xlu0 %v1171, 96
  %v1184 = vpop.permute.xlu0 %1183
  %v1185 = vsel %vm217, %v1166, 0
  %v1187 = vsel %vm217, %v1171, 0
  %v1189 = vsel %vm217, %v1182, 0
  %v1191 = vsel %vm217, %v1184, 0
  %1193 = vmatprep.subr.mxu0 0.0
  %1194 = vmatpush1.xpose.msra.mxu0 %v1189
  %1195 = vmatprep.subr.mxu0 0.0
  %1196 = vmatpush1.xpose.msra.mxu0 %v1191
  %1197 = vmatprep.subr.mxu0 0.0
  %1198 = vmatpush1.xpose.msra.mxu0 0.0
  %1199 = vmatprep.subr.mxu0 0.0
  %1200 = vmatpush1.xpose.msra.mxu0 0.0
  %1201 = vmatprep.subr.mxu0 0.0
  %1202 = vmatpush1.xpose.msra.mxu0 0.0
  %1203 = vmatprep.subr.mxu0 0.0
  %1204 = vmatpush1.xpose.msra.mxu0 0.0
  %1205 = vmatprep.subr.mxu0 0.0
  %1206 = vmatpush1.xpose.msra.mxu0 0.0
  %1207 = vmatprep.subr.mxu0 0.0
  %1208 = vmatpush1.xpose.msra.mxu0 0.0
  %1209 = vmatprep.subr.mxu0 0.0
  %1210 = vmatpush1.xpose.msra.mxu0 0.0
  %1211 = vmatprep.subr.mxu0 0.0
  %1212 = vmatpush1.xpose.msra.mxu0 0.0
  %1213 = vmatprep.subr.mxu0 0.0
  %1214 = vmatpush1.xpose.msra.mxu0 0.0
  %1215 = vmatprep.subr.mxu0 0.0
  %1216 = vmatpush1.xpose.msra.mxu0 0.0
  %1217 = vmatprep.subr.mxu0 0.0
  %1218 = vmatpush1.xpose.msra.mxu0 0.0
  %1219 = vmatprep.subr.mxu0 0.0
  %1220 = vmatpush1.xpose.msra.mxu0 0.0
  %1221 = vmatprep.subr.mxu0 0.0
  %1222 = vmatpush1.xpose.msra.mxu0 0.0
  %1223 = vmatprep.subr.mxu0 0.0
  %1224 = vmatpush1.xpose.msra.mxu0 0.0
  %1225 = vmatprep.subr.mxu0 0.0
  %1226 = vmatpush1.xpose.msra.mxu0 0.0
  %1227 = vmatprep.subr.mxu0 0.0
  %1228 = vmatpush1.xpose.msra.mxu0 0.0
  %1229 = vmatprep.subr.mxu0 0.0
  %1230 = vmatpush1.xpose.msra.mxu0 0.0
  %1231 = vmatprep.subr.mxu0 0.0
  %1232 = vmatpush1.xpose.msra.mxu0 0.0
  %1233 = vmatprep.subr.mxu0 0.0
  %1234 = vmatpush1.xpose.msra.mxu0 0.0
  %1235 = vmatprep.subr.mxu0 0.0
  %1236 = vmatpush1.xpose.msra.mxu0 0.0
  %1237 = vmatprep.subr.mxu0 0.0
  %1238 = vmatpush1.xpose.msra.mxu0 0.0
  %1239 = vmatprep.subr.mxu0 0.0
  %1240 = vmatpush1.xpose.msra.mxu0 0.0
  %1241 = vmatprep.subr.mxu0 0.0
  %1242 = vmatpush1.xpose.msra.mxu0 0.0
  %1243 = vmatprep.subr.mxu0 0.0
  %1244 = vmatpush1.xpose.msra.mxu0 0.0
  %1245 = vmatprep.subr.mxu0 0.0
  %1246 = vmatpush1.xpose.msra.mxu0 0.0
  %1247 = vmatprep.subr.mxu0 0.0
  %1248 = vmatpush1.xpose.msra.mxu0 0.0
  %1249 = vmatprep.subr.mxu0 0.0
  %1250 = vmatpush1.xpose.msra.mxu0 0.0
  %1251 = vmatprep.subr.mxu0 0.0
  %1252 = vmatpush1.xpose.msra.mxu0 0.0
  %1253 = vmatprep.subr.mxu0 0.0
  %1254 = vmatpush1.xpose.msra.mxu0 0.0
  %1255 = vmatprep.subr.mxu0 0.0
  %1256 = vmatpush1.xpose.msra.mxu0 0.0
  %1257 = vmatprep.mubr.f32.mxu0 0.0
  %1258 = vmatmul.mubr.f32.gmra.mrb[0].mxu0 %v1185
  %v1259 = vpop.f32.mrb[0].mxu0
  %v1260 = vadd.f32 %v113, %v1259
  %v1261 = vpop.f32.mrb[0].mxu0
  %1262 = vmatprep.mubr.f32.mxu0 0.0
  %1263 = vmatmul.mubr.f32.gmra.mrb[0].mxu0 %v1187
  %v1264 = vpop.f32.mrb[0].mxu0
  %v1265 = vadd.f32 %v114, %v1264
  %v1266 = vpop.f32.mrb[0].mxu0
  %1267 = vdwg.mxu0
  %v1268 = vsel %vm217, %v1260, -inf
  %1269 = vmax.xlane.f32.xlu0 %v1268
  %v1270 = vpop.xlane.xlu0 %1269
  %v1271 = vsel %vm217, %v1265, -inf
  %1272 = vmax.xlane.f32.xlu0 %v1271
  %v1273 = vpop.xlane.xlu0 %1272
  %v1274 = vsub.f32 %v1260, %v1270
  %v1275 = vsub.f32 %v1265, %v1273
  %v1276 = vmul.f32 %v1274, 1.442695
  %v1277 = vpow.pop %v1276
  %v1278 = vmul.f32 %v1275, 1.442695
  %v1279 = vpow.pop %v1278
  %v1280 = vsel %vm217, %v1277, 0.0
  %1281 = vadd.xlane.f32.xlu0 %v1280
  %v1282 = vpop.xlane.xlu0 %1281
  %v1283 = vsel %vm217, %v1279, 0.0
  %1284 = vadd.xlane.f32.xlu0 %v1283
  %v1285 = vpop.xlane.xlu0 %1284
  %v1286 = vrcp.pop %v1282
  %v1287 = vmul.f32 %v1277, %v1286
  %v1288 = vrcp.pop %v1285
  %v1289 = vmul.f32 %v1279, %v1288
  %1290 = vrot.lane.b32.xlu0 %v1166, 64
  %v1291 = vpop.permute.xlu0 %1290
  %1292 = vrot.lane.b32.xlu0 %v1171, 64
  %v1293 = vpop.permute.xlu0 %1292
  %v1297 = vsel %vm217, %v1287, 0
  %v1300 = vsel %vm217, %v1289, 0
  %1302 = vmatprep.subr.mxu0 0.0
  %1303 = vmatpush1.msra.mxu0 %v1291
  %1304 = vmatprep.subr.mxu0 0.0
  %1305 = vmatpush1.msra.mxu0 %v1293
  %1306 = vmatprep.subr.mxu0 0.0
  %1307 = vmatpush1.msra.mxu0 0.0
  %1308 = vmatprep.subr.mxu0 0.0
  %1309 = vmatpush1.msra.mxu0 0.0
  %1310 = vmatprep.subr.mxu0 0.0
  %1311 = vmatpush1.msra.mxu0 0.0
  %1312 = vmatprep.subr.mxu0 0.0
  %1313 = vmatpush1.msra.mxu0 0.0
  %1314 = vmatprep.subr.mxu0 0.0
  %1315 = vmatpush1.msra.mxu0 0.0
  %1316 = vmatprep.subr.mxu0 0.0
  %1317 = vmatpush1.msra.mxu0 0.0
  %1318 = vmatprep.subr.mxu0 0.0
  %1319 = vmatpush1.msra.mxu0 0.0
  %1320 = vmatprep.subr.mxu0 0.0
  %1321 = vmatpush1.msra.mxu0 0.0
  %1322 = vmatprep.subr.mxu0 0.0
  %1323 = vmatpush1.msra.mxu0 0.0
  %1324 = vmatprep.subr.mxu0 0.0
  %1325 = vmatpush1.msra.mxu0 0.0
  %1326 = vmatprep.subr.mxu0 0.0
  %1327 = vmatpush1.msra.mxu0 0.0
  %1328 = vmatprep.subr.mxu0 0.0
  %1329 = vmatpush1.msra.mxu0 0.0
  %1330 = vmatprep.subr.mxu0 0.0
  %1331 = vmatpush1.msra.mxu0 0.0
  %1332 = vmatprep.subr.mxu0 0.0
  %1333 = vmatpush1.msra.mxu0 0.0
  %1334 = vmatprep.subr.mxu0 0.0
  %1335 = vmatpush1.msra.mxu0 0.0
  %1336 = vmatprep.subr.mxu0 0.0
  %1337 = vmatpush1.msra.mxu0 0.0
  %1338 = vmatprep.subr.mxu0 0.0
  %1339 = vmatpush1.msra.mxu0 0.0
  %1340 = vmatprep.subr.mxu0 0.0
  %1341 = vmatpush1.msra.mxu0 0.0
  %1342 = vmatprep.subr.mxu0 0.0
  %1343 = vmatpush1.msra.mxu0 0.0
  %1344 = vmatprep.subr.mxu0 0.0
  %1345 = vmatpush1.msra.mxu0 0.0
  %1346 = vmatprep.subr.mxu0 0.0
  %1347 = vmatpush1.msra.mxu0 0.0
  %1348 = vmatprep.subr.mxu0 0.0
  %1349 = vmatpush1.msra.mxu0 0.0
  %1350 = vmatprep.subr.mxu0 0.0
  %1351 = vmatpush1.msra.mxu0 0.0
  %1352 = vmatprep.subr.mxu0 0.0
  %1353 = vmatpush1.msra.mxu0 0.0
  %1354 = vmatprep.subr.mxu0 0.0
  %1355 = vmatpush1.msra.mxu0 0.0
  %1356 = vmatprep.subr.mxu0 0.0
  %1357 = vmatpush1.msra.mxu0 0.0
  %1358 = vmatprep.subr.mxu0 0.0
  %1359 = vmatpush1.msra.mxu0 0.0
  %1360 = vmatprep.subr.mxu0 0.0
  %1361 = vmatpush1.msra.mxu0 0.0
  %1362 = vmatprep.subr.mxu0 0.0
  %1363 = vmatpush1.msra.mxu0 0.0
  %1364 = vmatprep.subr.mxu0 0.0
  %1365 = vmatpush1.msra.mxu0 0.0
  %1366 = vmatprep.mubr.f32.mxu0 0.0
  %1367 = vmatmul.mubr.f32.gmra.mrb[0].mxu0 %v1297
  %v1368 = vpop.f32.mrb[0].mxu0
  %v1369 = vadd.f32 0.0, %v1368
  %v1370 = vpop.f32.mrb[0].mxu0
  %1371 = vmatprep.mubr.f32.mxu0 0.0
  %1372 = vmatmul.mubr.f32.gmra.mrb[0].mxu0 %v1300
  %v1373 = vpop.f32.mrb[0].mxu0
  %v1374 = vadd.f32 0.0, %v1373
  %v1375 = vpop.f32.mrb[0].mxu0
  %1376 = vdwg.mxu0
  %1377 = vrot.lane.b32.xlu0 %v1166, 112
  %v1378 = vpop.permute.xlu0 %1377
  %1379 = vrot.lane.b32.xlu0 %v1171, 112
  %v1380 = vpop.permute.xlu0 %1379
  %1381 = vrot.lane.b32.xlu0 %v1166, 80
  %v1382 = vpop.permute.xlu0 %1381
  %1383 = vrot.lane.b32.xlu0 %v1171, 80
  %v1384 = vpop.permute.xlu0 %1383
  %v1385 = vsel %vm217, %v1378, 0
  %v1387 = vsel %vm217, %v1380, 0
  %v1389 = vsel %vm217, %v1382, 0
  %v1391 = vsel %vm217, %v1384, 0
  %1393 = vmatprep.subr.mxu0 0.0
  %1394 = vmatpush1.xpose.msra.mxu0 %v1389
  %1395 = vmatprep.subr.mxu0 0.0
  %1396 = vmatpush1.xpose.msra.mxu0 %v1391
  %1397 = vmatprep.subr.mxu0 0.0
  %1398 = vmatpush1.xpose.msra.mxu0 0.0
  %1399 = vmatprep.subr.mxu0 0.0
  %1400 = vmatpush1.xpose.msra.mxu0 0.0
  %1401 = vmatprep.subr.mxu0 0.0
  %1402 = vmatpush1.xpose.msra.mxu0 0.0
  %1403 = vmatprep.subr.mxu0 0.0
  %1404 = vmatpush1.xpose.msra.mxu0 0.0
  %1405 = vmatprep.subr.mxu0 0.0
  %1406 = vmatpush1.xpose.msra.mxu0 0.0
  %1407 = vmatprep.subr.mxu0 0.0
  %1408 = vmatpush1.xpose.msra.mxu0 0.0
  %1409 = vmatprep.subr.mxu0 0.0
  %1410 = vmatpush1.xpose.msra.mxu0 0.0
  %1411 = vmatprep.subr.mxu0 0.0
  %1412 = vmatpush1.xpose.msra.mxu0 0.0
  %1413 = vmatprep.subr.mxu0 0.0
  %1414 = vmatpush1.xpose.msra.mxu0 0.0
  %1415 = vmatprep.subr.mxu0 0.0
  %1416 = vmatpush1.xpose.msra.mxu0 0.0
  %1417 = vmatprep.subr.mxu0 0.0
  %1418 = vmatpush1.xpose.msra.mxu0 0.0
  %1419 = vmatprep.subr.mxu0 0.0
  %1420 = vmatpush1.xpose.msra.mxu0 0.0
  %1421 = vmatprep.subr.mxu0 0.0
  %1422 = vmatpush1.xpose.msra.mxu0 0.0
  %1423 = vmatprep.subr.mxu0 0.0
  %1424 = vmatpush1.xpose.msra.mxu0 0.0
  %1425 = vmatprep.subr.mxu0 0.0
  %1426 = vmatpush1.xpose.msra.mxu0 0.0
  %1427 = vmatprep.subr.mxu0 0.0
  %1428 = vmatpush1.xpose.msra.mxu0 0.0
  %1429 = vmatprep.subr.mxu0 0.0
  %1430 = vmatpush1.xpose.msra.mxu0 0.0
  %1431 = vmatprep.subr.mxu0 0.0
  %1432 = vmatpush1.xpose.msra.mxu0 0.0
  %1433 = vmatprep.subr.mxu0 0.0
  %1434 = vmatpush1.xpose.msra.mxu0 0.0
  %1435 = vmatprep.subr.mxu0 0.0
  %1436 = vmatpush1.xpose.msra.mxu0 0.0
  %1437 = vmatprep.subr.mxu0 0.0
  %1438 = vmatpush1.xpose.msra.mxu0 0.0
  %1439 = vmatprep.subr.mxu0 0.0
  %1440 = vmatpush1.xpose.msra.mxu0 0.0
  %1441 = vmatprep.subr.mxu0 0.0
  %1442 = vmatpush1.xpose.msra.mxu0 0.0
  %1443 = vmatprep.subr.mxu0 0.0
  %1444 = vmatpush1.xpose.msra.mxu0 0.0
  %1445 = vmatprep.subr.mxu0 0.0
  %1446 = vmatpush1.xpose.msra.mxu0 0.0
  %1447 = vmatprep.subr.mxu0 0.0
  %1448 = vmatpush1.xpose.msra.mxu0 0.0
  %1449 = vmatprep.subr.mxu0 0.0
  %1450 = vmatpush1.xpose.msra.mxu0 0.0
  %1451 = vmatprep.subr.mxu0 0.0
  %1452 = vmatpush1.xpose.msra.mxu0 0.0
  %1453 = vmatprep.subr.mxu0 0.0
  %1454 = vmatpush1.xpose.msra.mxu0 0.0
  %1455 = vmatprep.subr.mxu0 0.0
  %1456 = vmatpush1.xpose.msra.mxu0 0.0
  %1457 = vmatprep.mubr.f32.mxu0 0.0
  %1458 = vmatmul.mubr.f32.gmra.mrb[0].mxu0 %v1385
  %v1459 = vpop.f32.mrb[0].mxu0
  %v1460 = vadd.f32 %v113, %v1459
  %v1461 = vpop.f32.mrb[0].mxu0
  %1462 = vmatprep.mubr.f32.mxu0 0.0
  %1463 = vmatmul.mubr.f32.gmra.mrb[0].mxu0 %v1387
  %v1464 = vpop.f32.mrb[0].mxu0
  %v1465 = vadd.f32 %v114, %v1464
  %v1466 = vpop.f32.mrb[0].mxu0
  %1467 = vdwg.mxu0
  %v1468 = vsel %vm217, %v1460, -inf
  %1469 = vmax.xlane.f32.xlu0 %v1468
  %v1470 = vpop.xlane.xlu0 %1469
  %v1471 = vsel %vm217, %v1465, -inf
  %1472 = vmax.xlane.f32.xlu0 %v1471
  %v1473 = vpop.xlane.xlu0 %1472
  %v1474 = vsub.f32 %v1460, %v1470
  %v1475 = vsub.f32 %v1465, %v1473
  %v1476 = vmul.f32 %v1474, 1.442695
  %v1477 = vpow.pop %v1476
  %v1478 = vmul.f32 %v1475, 1.442695
  %v1479 = vpow.pop %v1478
  %v1480 = vsel %vm217, %v1477, 0.0
  %1481 = vadd.xlane.f32.xlu0 %v1480
  %v1482 = vpop.xlane.xlu0 %1481
  %v1483 = vsel %vm217, %v1479, 0.0
  %1484 = vadd.xlane.f32.xlu0 %v1483
  %v1485 = vpop.xlane.xlu0 %1484
  %v1486 = vrcp.pop %v1482
  %v1487 = vmul.f32 %v1477, %v1486
  %v1488 = vrcp.pop %v1485
  %v1489 = vmul.f32 %v1479, %v1488
  %1490 = vrot.lane.b32.xlu0 %v1166, 48
  %v1491 = vpop.permute.xlu0 %1490
  %1492 = vrot.lane.b32.xlu0 %v1171, 48
  %v1493 = vpop.permute.xlu0 %1492
  %v1497 = vsel %vm217, %v1487, 0
  %v1500 = vsel %vm217, %v1489, 0
  %1502 = vmatprep.subr.mxu0 0.0
  %1503 = vmatpush1.msra.mxu0 %v1491
  %1504 = vmatprep.subr.mxu0 0.0
  %1505 = vmatpush1.msra.mxu0 %v1493
  %1506 = vmatprep.subr.mxu0 0.0
  %1507 = vmatpush1.msra.mxu0 0.0
  %1508 = vmatprep.subr.mxu0 0.0
  %1509 = vmatpush1.msra.mxu0 0.0
  %1510 = vmatprep.subr.mxu0 0.0
  %1511 = vmatpush1.msra.mxu0 0.0
  %1512 = vmatprep.subr.mxu0 0.0
  %1513 = vmatpush1.msra.mxu0 0.0
  %1514 = vmatprep.subr.mxu0 0.0
  %1515 = vmatpush1.msra.mxu0 0.0
  %1516 = vmatprep.subr.mxu0 0.0
  %1517 = vmatpush1.msra.mxu0 0.0
  %1518 = vmatprep.subr.mxu0 0.0
  %1519 = vmatpush1.msra.mxu0 0.0
  %1520 = vmatprep.subr.mxu0 0.0
  %1521 = vmatpush1.msra.mxu0 0.0
  %1522 = vmatprep.subr.mxu0 0.0
  %1523 = vmatpush1.msra.mxu0 0.0
  %1524 = vmatprep.subr.mxu0 0.0
  %1525 = vmatpush1.msra.mxu0 0.0
  %1526 = vmatprep.subr.mxu0 0.0
  %1527 = vmatpush1.msra.mxu0 0.0
  %1528 = vmatprep.subr.mxu0 0.0
  %1529 = vmatpush1.msra.mxu0 0.0
  %1530 = vmatprep.subr.mxu0 0.0
  %1531 = vmatpush1.msra.mxu0 0.0
  %1532 = vmatprep.subr.mxu0 0.0
  %1533 = vmatpush1.msra.mxu0 0.0
  %1534 = vmatprep.subr.mxu0 0.0
  %1535 = vmatpush1.msra.mxu0 0.0
  %1536 = vmatprep.subr.mxu0 0.0
  %1537 = vmatpush1.msra.mxu0 0.0
  %1538 = vmatprep.subr.mxu0 0.0
  %1539 = vmatpush1.msra.mxu0 0.0
  %1540 = vmatprep.subr.mxu0 0.0
  %1541 = vmatpush1.msra.mxu0 0.0
  %1542 = vmatprep.subr.mxu0 0.0
  %1543 = vmatpush1.msra.mxu0 0.0
  %1544 = vmatprep.subr.mxu0 0.0
  %1545 = vmatpush1.msra.mxu0 0.0
  %1546 = vmatprep.subr.mxu0 0.0
  %1547 = vmatpush1.msra.mxu0 0.0
  %1548 = vmatprep.subr.mxu0 0.0
  %1549 = vmatpush1.msra.mxu0 0.0
  %1550 = vmatprep.subr.mxu0 0.0
  %1551 = vmatpush1.msra.mxu0 0.0
  %1552 = vmatprep.subr.mxu0 0.0
  %1553 = vmatpush1.msra.mxu0 0.0
  %1554 = vmatprep.subr.mxu0 0.0
  %1555 = vmatpush1.msra.mxu0 0.0
  %1556 = vmatprep.subr.mxu0 0.0
  %1557 = vmatpush1.msra.mxu0 0.0
  %1558 = vmatprep.subr.mxu0 0.0
  %1559 = vmatpush1.msra.mxu0 0.0
  %1560 = vmatprep.subr.mxu0 0.0
  %1561 = vmatpush1.msra.mxu0 0.0
  %1562 = vmatprep.subr.mxu0 0.0
  %1563 = vmatpush1.msra.mxu0 0.0
  %1564 = vmatprep.subr.mxu0 0.0
  %1565 = vmatpush1.msra.mxu0 0.0
  %1566 = vmatprep.mubr.f32.mxu0 0.0
  %1567 = vmatmul.mubr.f32.gmra.mrb[0].mxu0 %v1497
  %v1568 = vpop.f32.mrb[0].mxu0
  %v1569 = vadd.f32 0.0, %v1568
  %v1570 = vpop.f32.mrb[0].mxu0
  %1571 = vmatprep.mubr.f32.mxu0 0.0
  %1572 = vmatmul.mubr.f32.gmra.mrb[0].mxu0 %v1500
  %v1573 = vpop.f32.mrb[0].mxu0
  %v1574 = vadd.f32 0.0, %v1573
  %v1575 = vpop.f32.mrb[0].mxu0
  %1576 = vdwg.mxu0
  %v1578 = vsel %vm217, %v1569, 0
  %v1581 = vsel %vm217, %v1574, 0
  %1583 = vmatprep.subr.mxu0 0.0
  %1584 = vmatpush1.msra.mxu0 %v1177
  %1585 = vmatprep.subr.mxu0 0.0
  %1586 = vmatpush1.msra.mxu0 %v1178
  %1587 = vmatprep.subr.mxu0 0.0
  %1588 = vmatpush1.msra.mxu0 0.0
  %1589 = vmatprep.subr.mxu0 0.0
  %1590 = vmatpush1.msra.mxu0 0.0
  %1591 = vmatprep.subr.mxu0 0.0
  %1592 = vmatpush1.msra.mxu0 0.0
  %1593 = vmatprep.subr.mxu0 0.0
  %1594 = vmatpush1.msra.mxu0 0.0
  %1595 = vmatprep.subr.mxu0 0.0
  %1596 = vmatpush1.msra.mxu0 0.0
  %1597 = vmatprep.subr.mxu0 0.0
  %1598 = vmatpush1.msra.mxu0 0.0
  %1599 = vmatprep.subr.mxu0 0.0
  %1600 = vmatpush1.msra.mxu0 0.0
  %1601 = vmatprep.subr.mxu0 0.0
  %1602 = vmatpush1.msra.mxu0 0.0
  %1603 = vmatprep.subr.mxu0 0.0
  %1604 = vmatpush1.msra.mxu0 0.0
  %1605 = vmatprep.subr.mxu0 0.0
  %1606 = vmatpush1.msra.mxu0 0.0
  %1607 = vmatprep.subr.mxu0 0.0
  %1608 = vmatpush1.msra.mxu0 0.0
  %1609 = vmatprep.subr.mxu0 0.0
  %1610 = vmatpush1.msra.mxu0 0.0
  %1611 = vmatprep.subr.mxu0 0.0
  %1612 = vmatpush1.msra.mxu0 0.0
  %1613 = vmatprep.subr.mxu0 0.0
  %1614 = vmatpush1.msra.mxu0 0.0
  %1615 = vmatprep.subr.mxu0 0.0
  %1616 = vmatpush1.msra.mxu0 0.0
  %1617 = vmatprep.subr.mxu0 0.0
  %1618 = vmatpush1.msra.mxu0 0.0
  %1619 = vmatprep.subr.mxu0 0.0
  %1620 = vmatpush1.msra.mxu0 0.0
  %1621 = vmatprep.subr.mxu0 0.0
  %1622 = vmatpush1.msra.mxu0 0.0
  %1623 = vmatprep.subr.mxu0 0.0
  %1624 = vmatpush1.msra.mxu0 0.0
  %1625 = vmatprep.subr.mxu0 0.0
  %1626 = vmatpush1.msra.mxu0 0.0
  %1627 = vmatprep.subr.mxu0 0.0
  %1628 = vmatpush1.msra.mxu0 0.0
  %1629 = vmatprep.subr.mxu0 0.0
  %1630 = vmatpush1.msra.mxu0 0.0
  %1631 = vmatprep.subr.mxu0 0.0
  %1632 = vmatpush1.msra.mxu0 0.0
  %1633 = vmatprep.subr.mxu0 0.0
  %1634 = vmatpush1.msra.mxu0 0.0
  %1635 = vmatprep.subr.mxu0 0.0
  %1636 = vmatpush1.msra.mxu0 0.0
  %1637 = vmatprep.subr.mxu0 0.0
  %1638 = vmatpush1.msra.mxu0 0.0
  %1639 = vmatprep.subr.mxu0 0.0
  %1640 = vmatpush1.msra.mxu0 0.0
  %1641 = vmatprep.subr.mxu0 0.0
  %1642 = vmatpush1.msra.mxu0 0.0
  %1643 = vmatprep.subr.mxu0 0.0
  %1644 = vmatpush1.msra.mxu0 0.0
  %1645 = vmatprep.subr.mxu0 0.0
  %1646 = vmatpush1.msra.mxu0 0.0
  %1647 = vmatprep.mubr.f32.mxu0 0.0
  %1648 = vmatmul.mubr.f32.gmra.mrb[0].mxu0 %v1578
  %v1649 = vpop.f32.mrb[0].mxu0
  %v1650 = vadd.f32 0.0, %v1649
  %v1651 = vpop.f32.mrb[0].mxu0
  %1652 = vmatprep.mubr.f32.mxu0 0.0
  %1653 = vmatmul.mubr.f32.gmra.mrb[0].mxu0 %v1581
  %v1654 = vpop.f32.mrb[0].mxu0
  %v1655 = vadd.f32 0.0, %v1654
  %v1656 = vpop.f32.mrb[0].mxu0
  %1657 = vdwg.mxu0
  %v1659 = vsel %vm217, %v1369, 0
  %v1662 = vsel %vm217, %v1374, 0
  %1664 = vmatprep.subr.mxu0 0.0
  %1665 = vmatpush1.msra.mxu0 %v1175
  %1666 = vmatprep.subr.mxu0 0.0
  %1667 = vmatpush1.msra.mxu0 %v1176
  %1668 = vmatprep.subr.mxu0 0.0
  %1669 = vmatpush1.msra.mxu0 0.0
  %1670 = vmatprep.subr.mxu0 0.0
  %1671 = vmatpush1.msra.mxu0 0.0
  %1672 = vmatprep.subr.mxu0 0.0
  %1673 = vmatpush1.msra.mxu0 0.0
  %1674 = vmatprep.subr.mxu0 0.0
  %1675 = vmatpush1.msra.mxu0 0.0
  %1676 = vmatprep.subr.mxu0 0.0
  %1677 = vmatpush1.msra.mxu0 0.0
  %1678 = vmatprep.subr.mxu0 0.0
  %1679 = vmatpush1.msra.mxu0 0.0
  %1680 = vmatprep.subr.mxu0 0.0
  %1681 = vmatpush1.msra.mxu0 0.0
  %1682 = vmatprep.subr.mxu0 0.0
  %1683 = vmatpush1.msra.mxu0 0.0
  %1684 = vmatprep.subr.mxu0 0.0
  %1685 = vmatpush1.msra.mxu0 0.0
  %1686 = vmatprep.subr.mxu0 0.0
  %1687 = vmatpush1.msra.mxu0 0.0
  %1688 = vmatprep.subr.mxu0 0.0
  %1689 = vmatpush1.msra.mxu0 0.0
  %1690 = vmatprep.subr.mxu0 0.0
  %1691 = vmatpush1.msra.mxu0 0.0
  %1692 = vmatprep.subr.mxu0 0.0
  %1693 = vmatpush1.msra.mxu0 0.0
  %1694 = vmatprep.subr.mxu0 0.0
  %1695 = vmatpush1.msra.mxu0 0.0
  %1696 = vmatprep.subr.mxu0 0.0
  %1697 = vmatpush1.msra.mxu0 0.0
  %1698 = vmatprep.subr.mxu0 0.0
  %1699 = vmatpush1.msra.mxu0 0.0
  %1700 = vmatprep.subr.mxu0 0.0
  %1701 = vmatpush1.msra.mxu0 0.0
  %1702 = vmatprep.subr.mxu0 0.0
  %1703 = vmatpush1.msra.mxu0 0.0
  %1704 = vmatprep.subr.mxu0 0.0
  %1705 = vmatpush1.msra.mxu0 0.0
  %1706 = vmatprep.subr.mxu0 0.0
  %1707 = vmatpush1.msra.mxu0 0.0
  %1708 = vmatprep.subr.mxu0 0.0
  %1709 = vmatpush1.msra.mxu0 0.0
  %1710 = vmatprep.subr.mxu0 0.0
  %1711 = vmatpush1.msra.mxu0 0.0
  %1712 = vmatprep.subr.mxu0 0.0
  %1713 = vmatpush1.msra.mxu0 0.0
  %1714 = vmatprep.subr.mxu0 0.0
  %1715 = vmatpush1.msra.mxu0 0.0
  %1716 = vmatprep.subr.mxu0 0.0
  %1717 = vmatpush1.msra.mxu0 0.0
  %1718 = vmatprep.subr.mxu0 0.0
  %1719 = vmatpush1.msra.mxu0 0.0
  %1720 = vmatprep.subr.mxu0 0.0
  %1721 = vmatpush1.msra.mxu0 0.0
  %1722 = vmatprep.subr.mxu0 0.0
  %1723 = vmatpush1.msra.mxu0 0.0
  %1724 = vmatprep.subr.mxu0 0.0
  %1725 = vmatpush1.msra.mxu0 0.0
  %1726 = vmatprep.subr.mxu0 0.0
  %1727 = vmatpush1.msra.mxu0 0.0
  %1728 = vmatprep.mubr.f32.mxu0 0.0
  %1729 = vmatmul.mubr.f32.gmra.mrb[0].mxu0 %v1659
  %v1730 = vpop.f32.mrb[0].mxu0
  %v1731 = vadd.f32 %v1650, %v1730
  %v1732 = vpop.f32.mrb[0].mxu0
  %1733 = vmatprep.mubr.f32.mxu0 0.0
  %1734 = vmatmul.mubr.f32.gmra.mrb[0].mxu0 %v1662
  %v1735 = vpop.f32.mrb[0].mxu0
  %v1736 = vadd.f32 %v1655, %v1735
  %v1737 = vpop.f32.mrb[0].mxu0
  %1738 = vdwg.mxu0
  %s1739 = scalar_lea.vmem %s7, 1
  %v1740 = vld [vmem:[%s1739] sm:$0x1]
  %v1742 = vlaneseq
  %v1743 = vshrl.u32 %v1742, 7
  %v1744 = vsub.s32 0, %v1743
  %v1745 = vrot.slane %v1740, %v1744
  %v1747 = vadd.f32 %v1731, %v1745
  %v1748 = vadd.f32 %v1736, %v1745
  %v1749 = vadd.f32 %v1747, %v1078
  %v1750 = vadd.f32 %v1748, %v1079
  %s1751 = scalar_lea.vmem %s8, 1
  %v1752 = vld [vmem:[%s1751] sm:$0x1]
  %s1753 = scalar_lea.vmem %s9, 1
  %v1754 = vld [vmem:[%s1753] sm:$0x1]
  %v1755 = vsel %vm69, %v1749, 0.0
  %1756 = vadd.xlane.f32.xlu0 %v1755
  %v1757 = vpop.xlane.xlu0 %1756
  %v1758 = vsel %vm69, %v1750, 0.0
  %1759 = vadd.xlane.f32.xlu0 %v1758
  %v1760 = vpop.xlane.xlu0 %1759
  %v1761 = vmul.f32 %v1757, %v76
  %v1762 = vmul.f32 %v1760, %v76
  %v1763 = vsub.f32 %v1749, %v1761
  %v1764 = vsub.f32 %v1750, %v1762
  %v1765 = vmul.f32 %v1763, %v1763
  %v1766 = vmul.f32 %v1764, %v1764
  %v1767 = vsel %vm69, %v1765, 0.0
  %1768 = vadd.xlane.f32.xlu0 %v1767
  %v1769 = vpop.xlane.xlu0 %1768
  %v1770 = vsel %vm69, %v1766, 0.0
  %1771 = vadd.xlane.f32.xlu0 %v1770
  %v1772 = vpop.xlane.xlu0 %1771
  %v1773 = vmul.f32 %v1769, %v76
  %v1774 = vmul.f32 %v1772, %v76
  %v1775 = vadd.f32 %v1773, 1e-12
  %v1776 = vadd.f32 %v1774, 1e-12
  %v1777 = vrsqrt.pop %v1775
  %v1778 = vrsqrt.pop %v1776
  %v1779 = vmul.f32 %v1763, %v1777
  %v1780 = vmul.f32 %v1764, %v1778
  %v1782 = vlaneseq
  %v1783 = vshrl.u32 %v1782, 7
  %v1784 = vsub.s32 0, %v1783
  %v1785 = vrot.slane %v1752, %v1784
  %v1787 = vmul.f32 %v1779, %v1785
  %v1788 = vmul.f32 %v1780, %v1785
  %v1790 = vlaneseq
  %v1791 = vshrl.u32 %v1790, 7
  %v1792 = vsub.s32 0, %v1791
  %v1793 = vrot.slane %v1754, %v1792
  %v1795 = vadd.f32 %v1787, %v1793
  %v1796 = vadd.f32 %v1788, %v1793
  %s1797 = scalar_lea.vmem %s10, 32
  %v1798 = vld [vmem:[%s1797] sm:$0xff]
  %v1799 = vld [vmem:[%s1797 + $0x8] sm:$0xff]
  %v1800 = vld [vmem:[%s1797 + $0x10] sm:$0xff]
  %v1801 = vld [vmem:[%s1797 + $0x18] sm:$0xff]
  %s1802 = scalar_lea.vmem %s11, 1
  %v1803 = vld [vmem:[%s1802] sm:$0x1]
  %v1805 = vlaneseq
  %v1806 = vshrl.u32 %v1805, 7
  %v1807 = vsub.s32 0, %v1806
  %v1808 = vrot.slane %v1803, %v1807
  %v1811 = vsel %vm69, %v1795, 0
  %v1814 = vsel %vm69, %v1796, 0
  %1816 = vmatprep.subr.mxu0 0.0
  %1817 = vmatpush1.msra.mxu0 %v1798
  %1818 = vmatprep.subr.mxu0 0.0
  %1819 = vmatpush1.msra.mxu0 %v1799
  %1820 = vmatprep.subr.mxu0 0.0
  %1821 = vmatpush1.msra.mxu0 %v1800
  %1822 = vmatprep.subr.mxu0 0.0
  %1823 = vmatpush1.msra.mxu0 %v1801
  %1824 = vmatprep.subr.mxu0 0.0
  %1825 = vmatpush1.msra.mxu0 0.0
  %1826 = vmatprep.subr.mxu0 0.0
  %1827 = vmatpush1.msra.mxu0 0.0
  %1828 = vmatprep.subr.mxu0 0.0
  %1829 = vmatpush1.msra.mxu0 0.0
  %1830 = vmatprep.subr.mxu0 0.0
  %1831 = vmatpush1.msra.mxu0 0.0
  %1832 = vmatprep.subr.mxu0 0.0
  %1833 = vmatpush1.msra.mxu0 0.0
  %1834 = vmatprep.subr.mxu0 0.0
  %1835 = vmatpush1.msra.mxu0 0.0
  %1836 = vmatprep.subr.mxu0 0.0
  %1837 = vmatpush1.msra.mxu0 0.0
  %1838 = vmatprep.subr.mxu0 0.0
  %1839 = vmatpush1.msra.mxu0 0.0
  %1840 = vmatprep.subr.mxu0 0.0
  %1841 = vmatpush1.msra.mxu0 0.0
  %1842 = vmatprep.subr.mxu0 0.0
  %1843 = vmatpush1.msra.mxu0 0.0
  %1844 = vmatprep.subr.mxu0 0.0
  %1845 = vmatpush1.msra.mxu0 0.0
  %1846 = vmatprep.subr.mxu0 0.0
  %1847 = vmatpush1.msra.mxu0 0.0
  %1848 = vmatprep.subr.mxu0 0.0
  %1849 = vmatpush1.msra.mxu0 0.0
  %1850 = vmatprep.subr.mxu0 0.0
  %1851 = vmatpush1.msra.mxu0 0.0
  %1852 = vmatprep.subr.mxu0 0.0
  %1853 = vmatpush1.msra.mxu0 0.0
  %1854 = vmatprep.subr.mxu0 0.0
  %1855 = vmatpush1.msra.mxu0 0.0
  %1856 = vmatprep.subr.mxu0 0.0
  %1857 = vmatpush1.msra.mxu0 0.0
  %1858 = vmatprep.subr.mxu0 0.0
  %1859 = vmatpush1.msra.mxu0 0.0
  %1860 = vmatprep.subr.mxu0 0.0
  %1861 = vmatpush1.msra.mxu0 0.0
  %1862 = vmatprep.subr.mxu0 0.0
  %1863 = vmatpush1.msra.mxu0 0.0
  %1864 = vmatprep.subr.mxu0 0.0
  %1865 = vmatpush1.msra.mxu0 0.0
  %1866 = vmatprep.subr.mxu0 0.0
  %1867 = vmatpush1.msra.mxu0 0.0
  %1868 = vmatprep.subr.mxu0 0.0
  %1869 = vmatpush1.msra.mxu0 0.0
  %1870 = vmatprep.subr.mxu0 0.0
  %1871 = vmatpush1.msra.mxu0 0.0
  %1872 = vmatprep.subr.mxu0 0.0
  %1873 = vmatpush1.msra.mxu0 0.0
  %1874 = vmatprep.subr.mxu0 0.0
  %1875 = vmatpush1.msra.mxu0 0.0
  %1876 = vmatprep.subr.mxu0 0.0
  %1877 = vmatpush1.msra.mxu0 0.0
  %1878 = vmatprep.subr.mxu0 0.0
  %1879 = vmatpush1.msra.mxu0 0.0
  %1880 = vmatprep.mubr.f32.mxu0 0.0
  %1881 = vmatmul.mubr.f32.gmra.mrb[0].mxu0 %v1811
  %v1882 = vpop.f32.mrb[0].mxu0
  %v1883 = vadd.f32 %v1808, %v1882
  %v1884 = vpop.f32.mrb[0].mxu0
  %1885 = vmatprep.mubr.f32.mxu0 0.0
  %1886 = vmatmul.mubr.f32.gmra.mrb[0].mxu0 %v1814
  %v1887 = vpop.f32.mrb[0].mxu0
  %v1888 = vadd.f32 %v1808, %v1887
  %v1889 = vpop.f32.mrb[0].mxu0
  %1890 = vdwg.mxu0
  %v1891 = vmul.f32 %v1883, 0.5
  %v1892 = vmul.f32 %v1888, 0.5
  %v1893 = vmul.f32 %v1883, 0.044715
  %v1894 = vmul.f32 %v1888, 0.044715
  %v1895 = vmul.f32 %v1893, %v1883
  %v1896 = vmul.f32 %v1894, %v1888
  %v1897 = vmul.f32 %v1895, %v1883
  %v1898 = vmul.f32 %v1896, %v1888
  %v1899 = vadd.f32 %v1883, %v1897
  %v1900 = vadd.f32 %v1888, %v1898
  %v1901 = vmul.f32 %v1899, 0.7978846
  %v1902 = vmul.f32 %v1900, 0.7978846
  %v1903 = vtanh.pop %v1901
  %v1904 = vtanh.pop %v1902
  %v1905 = vadd.f32 %v1903, 1.0
  %v1906 = vadd.f32 %v1904, 1.0
  %v1907 = vmul.f32 %v1891, %v1905
  %v1908 = vmul.f32 %v1892, %v1906
  %s1909 = scalar_lea.vmem %s12, 64
  %v1910 = vld [vmem:[%s1909] sm:$0xff]
  %v1911 = vld [vmem:[%s1909 + $0x8] sm:$0xff]
  %v1912 = vld [vmem:[%s1909 + $0x10] sm:$0xff]
  %v1913 = vld [vmem:[%s1909 + $0x18] sm:$0xff]
  %v1914 = vld [vmem:[%s1909 + $0x20] sm:$0xff]
  %v1915 = vld [vmem:[%s1909 + $0x28] sm:$0xff]
  %v1916 = vld [vmem:[%s1909 + $0x30] sm:$0xff]
  %v1917 = vld [vmem:[%s1909 + $0x38] sm:$0xff]
  %s1918 = scalar_lea.vmem %s13, 1
  %v1919 = vld [vmem:[%s1918] sm:$0x1]
  %v1921 = vlaneseq
  %v1922 = vshrl.u32 %v1921, 7
  %v1923 = vsub.s32 0, %v1922
  %v1924 = vrot.slane %v1919, %v1923
  %v1927 = vsel %vm952, %v1907, 0
  %v1930 = vsel %vm952, %v1908, 0
  %1932 = vmatprep.subr.mxu0 0.0
  %1933 = vmatpush1.msra.mxu0 %v1910
  %1934 = vmatprep.subr.mxu0 0.0
  %1935 = vmatpush1.msra.mxu0 %v1911
  %1936 = vmatprep.subr.mxu0 0.0
  %1937 = vmatpush1.msra.mxu0 %v1912
  %1938 = vmatprep.subr.mxu0 0.0
  %1939 = vmatpush1.msra.mxu0 %v1913
  %1940 = vmatprep.subr.mxu0 0.0
  %1941 = vmatpush1.msra.mxu0 %v1914
  %1942 = vmatprep.subr.mxu0 0.0
  %1943 = vmatpush1.msra.mxu0 %v1915
  %1944 = vmatprep.subr.mxu0 0.0
  %1945 = vmatpush1.msra.mxu0 %v1916
  %1946 = vmatprep.subr.mxu0 0.0
  %1947 = vmatpush1.msra.mxu0 %v1917
  %1948 = vmatprep.subr.mxu0 0.0
  %1949 = vmatpush1.msra.mxu0 0.0
  %1950 = vmatprep.subr.mxu0 0.0
  %1951 = vmatpush1.msra.mxu0 0.0
  %1952 = vmatprep.subr.mxu0 0.0
  %1953 = vmatpush1.msra.mxu0 0.0
  %1954 = vmatprep.subr.mxu0 0.0
  %1955 = vmatpush1.msra.mxu0 0.0
  %1956 = vmatprep.subr.mxu0 0.0
  %1957 = vmatpush1.msra.mxu0 0.0
  %1958 = vmatprep.subr.mxu0 0.0
  %1959 = vmatpush1.msra.mxu0 0.0
  %1960 = vmatprep.subr.mxu0 0.0
  %1961 = vmatpush1.msra.mxu0 0.0
  %1962 = vmatprep.subr.mxu0 0.0
  %1963 = vmatpush1.msra.mxu0 0.0
  %1964 = vmatprep.subr.mxu0 0.0
  %1965 = vmatpush1.msra.mxu0 0.0
  %1966 = vmatprep.subr.mxu0 0.0
  %1967 = vmatpush1.msra.mxu0 0.0
  %1968 = vmatprep.subr.mxu0 0.0
  %1969 = vmatpush1.msra.mxu0 0.0
  %1970 = vmatprep.subr.mxu0 0.0
  %1971 = vmatpush1.msra.mxu0 0.0
  %1972 = vmatprep.subr.mxu0 0.0
  %1973 = vmatpush1.msra.mxu0 0.0
  %1974 = vmatprep.subr.mxu0 0.0
  %1975 = vmatpush1.msra.mxu0 0.0
  %1976 = vmatprep.subr.mxu0 0.0
  %1977 = vmatpush1.msra.mxu0 0.0
  %1978 = vmatprep.subr.mxu0 0.0
  %1979 = vmatpush1.msra.mxu0 0.0
  %1980 = vmatprep.subr.mxu0 0.0
  %1981 = vmatpush1.msra.mxu0 0.0
  %1982 = vmatprep.subr.mxu0 0.0
  %1983 = vmatpush1.msra.mxu0 0.0
  %1984 = vmatprep.subr.mxu0 0.0
  %1985 = vmatpush1.msra.mxu0 0.0
  %1986 = vmatprep.subr.mxu0 0.0
  %1987 = vmatpush1.msra.mxu0 0.0
  %1988 = vmatprep.subr.mxu0 0.0
  %1989 = vmatpush1.msra.mxu0 0.0
  %1990 = vmatprep.subr.mxu0 0.0
  %1991 = vmatpush1.msra.mxu0 0.0
  %1992 = vmatprep.subr.mxu0 0.0
  %1993 = vmatpush1.msra.mxu0 0.0
  %1994 = vmatprep.subr.mxu0 0.0
  %1995 = vmatpush1.msra.mxu0 0.0
  %1996 = vmatprep.mubr.f32.mxu0 0.0
  %1997 = vmatmul.mubr.f32.gmra.mrb[0].mxu0 %v1927
  %v1998 = vpop.f32.mrb[0].mxu0
  %v1999 = vadd.f32 %v1924, %v1998
  %v2000 = vpop.f32.mrb[0].mxu0
  %2001 = vmatprep.mubr.f32.mxu0 0.0
  %2002 = vmatmul.mubr.f32.gmra.mrb[0].mxu0 %v1930
  %v2003 = vpop.f32.mrb[0].mxu0
  %v2004 = vadd.f32 %v1924, %v2003
  %v2005 = vpop.f32.mrb[0].mxu0
  %2006 = vdwg.mxu0
  %v2007 = vadd.f32 %v1999, %v1795
  %v2008 = vadd.f32 %v2004, %v1796
  %s2009 = scalar_lea.vmem %s14, 1
  %v2010 = vld [vmem:[%s2009] sm:$0x1]
  %s2011 = scalar_lea.vmem %s15, 1
  %v2012 = vld [vmem:[%s2011] sm:$0x1]
  %v2013 = vsel %vm69, %v2007, 0.0
  %2014 = vadd.xlane.f32.xlu0 %v2013
  %v2015 = vpop.xlane.xlu0 %2014
  %v2016 = vsel %vm69, %v2008, 0.0
  %2017 = vadd.xlane.f32.xlu0 %v2016
  %v2018 = vpop.xlane.xlu0 %2017
  %v2019 = vmul.f32 %v2015, %v76
  %v2020 = vmul.f32 %v2018, %v76
  %v2021 = vsub.f32 %v2007, %v2019
  %v2022 = vsub.f32 %v2008, %v2020
  %v2023 = vmul.f32 %v2021, %v2021
  %v2024 = vmul.f32 %v2022, %v2022
  %v2025 = vsel %vm69, %v2023, 0.0
  %2026 = vadd.xlane.f32.xlu0 %v2025
  %v2027 = vpop.xlane.xlu0 %2026
  %v2028 = vsel %vm69, %v2024, 0.0
  %2029 = vadd.xlane.f32.xlu0 %v2028
  %v2030 = vpop.xlane.xlu0 %2029
  %v2031 = vmul.f32 %v2027, %v76
  %v2032 = vmul.f32 %v2030, %v76
  %v2033 = vadd.f32 %v2031, 1e-12
  %v2034 = vadd.f32 %v2032, 1e-12
  %v2035 = vrsqrt.pop %v2033
  %v2036 = vrsqrt.pop %v2034
  %v2037 = vmul.f32 %v2021, %v2035
  %v2038 = vmul.f32 %v2022, %v2036
  %v2040 = vlaneseq
  %v2041 = vshrl.u32 %v2040, 7
  %v2042 = vsub.s32 0, %v2041
  %v2043 = vrot.slane %v2010, %v2042
  %v2045 = vmul.f32 %v2037, %v2043
  %v2046 = vmul.f32 %v2038, %v2043
  %v2048 = vlaneseq
  %v2049 = vshrl.u32 %v2048, 7
  %v2050 = vsub.s32 0, %v2049
  %v2051 = vrot.slane %v2012, %v2050
  %v2053 = vadd.f32 %v2045, %v2051
  %v2054 = vadd.f32 %v2046, %v2051
  %v2056 = vrot.slane %v2054, 7
  %vm2058 = vcmask 1040384
  %v2059 = vsel %vm2058, %v2053, %v2056
  %v2060 = vld [vmem:[%s16] sm:$0xff]
  %v2061 = vld [vmem:[%s16 + $0x8] sm:$0xff]
  %v2062 = vld [vmem:[%s16 + $0x10] sm:$0xff]
  %v2063 = vld [vmem:[%s16 + $0x18] sm:$0xff]
  %v2064 = vld [vmem:[%s17] sm:$0x1]
  %v2066 = vlaneseq
  %v2067 = vshrl.u32 %v2066, 7
  %v2068 = vsub.s32 0, %v2067
  %v2069 = vrot.slane %v2064, %v2068
  %v2072 = vsel %vm69, %v2059, 0
  %2074 = vmatprep.subr.mxu0 0.0
  %2075 = vmatpush1.msra.mxu0 %v2060
  %2076 = vmatprep.subr.mxu0 0.0
  %2077 = vmatpush1.msra.mxu0 %v2061
  %2078 = vmatprep.subr.mxu0 0.0
  %2079 = vmatpush1.msra.mxu0 %v2062
  %2080 = vmatprep.subr.mxu0 0.0
  %2081 = vmatpush1.msra.mxu0 %v2063
  %2082 = vmatprep.subr.mxu0 0.0
  %2083 = vmatpush1.msra.mxu0 0.0
  %2084 = vmatprep.subr.mxu0 0.0
  %2085 = vmatpush1.msra.mxu0 0.0
  %2086 = vmatprep.subr.mxu0 0.0
  %2087 = vmatpush1.msra.mxu0 0.0
  %2088 = vmatprep.subr.mxu0 0.0
  %2089 = vmatpush1.msra.mxu0 0.0
  %2090 = vmatprep.subr.mxu0 0.0
  %2091 = vmatpush1.msra.mxu0 0.0
  %2092 = vmatprep.subr.mxu0 0.0
  %2093 = vmatpush1.msra.mxu0 0.0
  %2094 = vmatprep.subr.mxu0 0.0
  %2095 = vmatpush1.msra.mxu0 0.0
  %2096 = vmatprep.subr.mxu0 0.0
  %2097 = vmatpush1.msra.mxu0 0.0
  %2098 = vmatprep.subr.mxu0 0.0
  %2099 = vmatpush1.msra.mxu0 0.0
  %2100 = vmatprep.subr.mxu0 0.0
  %2101 = vmatpush1.msra.mxu0 0.0
  %2102 = vmatprep.subr.mxu0 0.0
  %2103 = vmatpush1.msra.mxu0 0.0
  %2104 = vmatprep.subr.mxu0 0.0
  %2105 = vmatpush1.msra.mxu0 0.0
  %2106 = vmatprep.subr.mxu0 0.0
  %2107 = vmatpush1.msra.mxu0 0.0
  %2108 = vmatprep.subr.mxu0 0.0
  %2109 = vmatpush1.msra.mxu0 0.0
  %2110 = vmatprep.subr.mxu0 0.0
  %2111 = vmatpush1.msra.mxu0 0.0
  %2112 = vmatprep.subr.mxu0 0.0
  %2113 = vmatpush1.msra.mxu0 0.0
  %2114 = vmatprep.subr.mxu0 0.0
  %2115 = vmatpush1.msra.mxu0 0.0
  %2116 = vmatprep.subr.mxu0 0.0
  %2117 = vmatpush1.msra.mxu0 0.0
  %2118 = vmatprep.subr.mxu0 0.0
  %2119 = vmatpush1.msra.mxu0 0.0
  %2120 = vmatprep.subr.mxu0 0.0
  %2121 = vmatpush1.msra.mxu0 0.0
  %2122 = vmatprep.subr.mxu0 0.0
  %2123 = vmatpush1.msra.mxu0 0.0
  %2124 = vmatprep.subr.mxu0 0.0
  %2125 = vmatpush1.msra.mxu0 0.0
  %2126 = vmatprep.subr.mxu0 0.0
  %2127 = vmatpush1.msra.mxu0 0.0
  %2128 = vmatprep.subr.mxu0 0.0
  %2129 = vmatpush1.msra.mxu0 0.0
  %2130 = vmatprep.subr.mxu0 0.0
  %2131 = vmatpush1.msra.mxu0 0.0
  %2132 = vmatprep.subr.mxu0 0.0
  %2133 = vmatpush1.msra.mxu0 0.0
  %2134 = vmatprep.subr.mxu0 0.0
  %2135 = vmatpush1.msra.mxu0 0.0
  %2136 = vmatprep.subr.mxu0 0.0
  %2137 = vmatpush1.msra.mxu0 0.0
  %2138 = vmatprep.mubr.f32.mxu0 0.0
  %2139 = vmatmul.mubr.f32.gmra.mrb[0].mxu0 %v2072
  %v2140 = vpop.f32.mrb[0].mxu0
  %v2141 = vadd.f32 %v2069, %v2140
  %v2142 = vpop.f32.mrb[0].mxu0
  %2143 = vdwg.mxu0
  %v2144 = vtanh.pop %v2141
  %v2145 = vld [vmem:[%s18] sm:$0xff]
  %v2146 = vld [vmem:[%s18 + $0x8] sm:$0xff]
  %v2147 = vld [vmem:[%s18 + $0x10] sm:$0xff]
  %v2148 = vld [vmem:[%s18 + $0x18] sm:$0xff]
  %v2149 = vld [vmem:[%s19] sm:$0x1]
  %v2151 = vlaneseq
  %v2152 = vshrl.u32 %v2151, 7
  %v2153 = vsub.s32 0, %v2152
  %v2154 = vrot.slane %v2149, %v2153
  %v2157 = vsel %vm69, %v2144, 0
  %2159 = vmatprep.subr.mxu0 0.0
  %2160 = vmatpush1.msra.mxu0 %v2145
  %2161 = vmatprep.subr.mxu0 0.0
  %2162 = vmatpush1.msra.mxu0 %v2146
  %2163 = vmatprep.subr.mxu0 0.0
  %2164 = vmatpush1.msra.mxu0 %v2147
  %2165 = vmatprep.subr.mxu0 0.0
  %2166 = vmatpush1.msra.mxu0 %v2148
  %2167 = vmatprep.subr.mxu0 0.0
  %2168 = vmatpush1.msra.mxu0 0.0
  %2169 = vmatprep.subr.mxu0 0.0
  %2170 = vmatpush1.msra.mxu0 0.0
  %2171 = vmatprep.subr.mxu0 0.0
  %2172 = vmatpush1.msra.mxu0 0.0
  %2173 = vmatprep.subr.mxu0 0.0
  %2174 = vmatpush1.msra.mxu0 0.0
  %2175 = vmatprep.subr.mxu0 0.0
  %2176 = vmatpush1.msra.mxu0 0.0
  %2177 = vmatprep.subr.mxu0 0.0
  %2178 = vmatpush1.msra.mxu0 0.0
  %2179 = vmatprep.subr.mxu0 0.0
  %2180 = vmatpush1.msra.mxu0 0.0
  %2181 = vmatprep.subr.mxu0 0.0
  %2182 = vmatpush1.msra.mxu0 0.0
  %2183 = vmatprep.subr.mxu0 0.0
  %2184 = vmatpush1.msra.mxu0 0.0
  %2185 = vmatprep.subr.mxu0 0.0
  %2186 = vmatpush1.msra.mxu0 0.0
  %2187 = vmatprep.subr.mxu0 0.0
  %2188 = vmatpush1.msra.mxu0 0.0
  %2189 = vmatprep.subr.mxu0 0.0
  %2190 = vmatpush1.msra.mxu0 0.0
  %2191 = vmatprep.subr.mxu0 0.0
  %2192 = vmatpush1.msra.mxu0 0.0
  %2193 = vmatprep.subr.mxu0 0.0
  %2194 = vmatpush1.msra.mxu0 0.0
  %2195 = vmatprep.subr.mxu0 0.0
  %2196 = vmatpush1.msra.mxu0 0.0
  %2197 = vmatprep.subr.mxu0 0.0
  %2198 = vmatpush1.msra.mxu0 0.0
  %2199 = vmatprep.subr.mxu0 0.0
  %2200 = vmatpush1.msra.mxu0 0.0
  %2201 = vmatprep.subr.mxu0 0.0
  %2202 = vmatpush1.msra.mxu0 0.0
  %2203 = vmatprep.subr.mxu0 0.0
  %2204 = vmatpush1.msra.mxu0 0.0
  %2205 = vmatprep.subr.mxu0 0.0
  %2206 = vmatpush1.msra.mxu0 0.0
  %2207 = vmatprep.subr.mxu0 0.0
  %2208 = vmatpush1.msra.mxu0 0.0
  %2209 = vmatprep.subr.mxu0 0.0
  %2210 = vmatpush1.msra.mxu0 0.0
  %2211 = vmatprep.subr.mxu0 0.0
  %2212 = vmatpush1.msra.mxu0 0.0
  %2213 = vmatprep.subr.mxu0 0.0
  %2214 = vmatpush1.msra.mxu0 0.0
  %2215 = vmatprep.subr.mxu0 0.0
  %2216 = vmatpush1.msra.mxu0 0.0
  %2217 = vmatprep.subr.mxu0 0.0
  %2218 = vmatpush1.msra.mxu0 0.0
  %2219 = vmatprep.subr.mxu0 0.0
  %2220 = vmatpush1.msra.mxu0 0.0
  %2221 = vmatprep.subr.mxu0 0.0
  %2222 = vmatpush1.msra.mxu0 0.0
  %2223 = vmatprep.mubr.f32.mxu0 0.0
  %2224 = vmatmul.mubr.f32.gmra.mrb[0].mxu0 %v2157
  %v2225 = vpop.f32.mrb[0].mxu0
  %v2226 = vadd.f32 %v2154, %v2225
  %v2227 = vpop.f32.mrb[0].mxu0
  %2228 = vdwg.mxu0
  %vm2229 = vcmask 1041408
  %v2230 = vsel %vm2229, %v2226, 0.0
  %2231 = vst [vmem:[%s20] sm:$0xff] %v2230
  // Predicated region
  $region82: #{bert_clf_forward.1} parent=0 // pred_check
    _
  $region83: #{bert_clf_forward.1} parent=0 // pred_check_branch
    %2233 = sbr.rel (0) target = $region85
  $region84: #{bert_clf_forward.1} parent=0 // pred_region
    _
  $region85: #{bert_clf_forward.1} parent=0 // pred_fallthru
    _
  // Predicated region
  $region86: #{bert_clf_forward.1} parent=0 // pred_check
    _
  $region87: #{bert_clf_forward.1} parent=0 // pred_check_branch
    %2235 = sbr.rel (0) target = $region89
  $region88: #{bert_clf_forward.1} parent=0 // pred_region
    _
  $region89: #{bert_clf_forward.1} parent=0 // pred_fallthru
    _

</llo_original>
